<compile_context>
chip_gen: v6e
topology: v6e:2x2x1
jax: 0.10.0
libtpu: 0.0.40
codegen_flags: <defaults>
</compile_context>

<pallas_src>
import jax
import jax.numpy as jnp
from jax.experimental import pallas as pl
from jax.experimental.pallas import tpu as pltpu

# ----------------------------- dimensions -----------------------------------
C = 8         # children per parent node
F = 32        # raw child feature dim
H = 32        # embedding / hidden dim (parent_vec dim)
T = 16        # target feature dim
NC = 4        # number of classes
NC_PAD = 128  # logits padded to one full 128-lane vreg (unmasked stores)

B = 64        # number of independent parent nodes processed per call
BB = 64       # nodes per grid step -> BB*C = 512 child rows; grid=(1,) at B=64


# ------------------------------- kernel --------------------------------------
def combined_net_kernel(parent_ref, children_ref, target_ref,
                        w1_ref, b1_ref, w2c_ref, w2p_ref, b2_ref,
                        w3p_ref, w3t_ref, b3_ref, rep_ref, segsum_ref,
                        new_children_ref, logits_ref):
    parent = parent_ref[...]          # [BB, H]
    children = children_ref[...]      # [BB*C, F]
    target = target_ref[...]          # [BB, T]

    # child_embed_net: children_vecs = relu(children @ W1 + b1)          [BB*C, H]
    children_vecs = jnp.maximum(
        jnp.dot(children, w1_ref[...], preferred_element_type=jnp.float32)
        + b1_ref[...],
        0.0,
    )

    # edge_embed_net (concat matmul split, no lane concat / row replication):
    #   child side : children_vecs @ W2c                                 [BB*C, H]
    #   parent side: rep @ (parent @ W2p)   (rep = 0/1 child->parent map) [BB*C, H]
    # The replication runs on the idle MXU instead of a VMEM/XLU relayout.
    parent_edge = jnp.dot(parent, w2p_ref[...],
                          preferred_element_type=jnp.float32)            # [BB, H]
    parent_rep = jnp.dot(rep_ref[...], parent_edge,
                         preferred_element_type=jnp.float32)             # [BB*C, H]
    new_children = jnp.maximum(
        jnp.dot(children_vecs, w2c_ref[...], preferred_element_type=jnp.float32)
        + parent_rep + b2_ref[...],
        0.0,
    )
    new_children_ref[...] = new_children

    # new_parent = mean_c(new_children) * 0.5 + parent * 0.5
    # segsum already carries the 0.5/C scale -> one MXU push, no strided
    # sublane reduction / (bb, c, h) reshape.
    child_blend = jnp.dot(segsum_ref[...], new_children,
                          preferred_element_type=jnp.float32)            # [BB, H]
    new_parent = child_blend + parent * 0.5

    # classification_net (concat matmul split, weights pre-padded to 128 lanes):
    # logits = new_parent @ W3p_pad + target @ W3t_pad + b3_pad          [BB, 128]
    logits_ref[...] = (
        jnp.dot(new_parent, w3p_ref[...], preferred_element_type=jnp.float32)
        + jnp.dot(target, w3t_ref[...], preferred_element_type=jnp.float32)
        + b3_ref[...]
    )


# ------------------------ one-time param preprocessing -------------------------
def prepare_params(params):
    """Hoisted out of the per-call path: lane-pad the classification weights and
    build the resident 0/1 replication / scaled segment-sum matrices."""
    w3p_pad = jnp.zeros((H, NC_PAD), jnp.float32).at[:, :NC].set(params["w3p"])
    w3t_pad = jnp.zeros((T, NC_PAD), jnp.float32).at[:, :NC].set(params["w3t"])
    b3_pad = jnp.zeros((1, NC_PAD), jnp.float32).at[:, :NC].set(params["b3"])

    node_id = jnp.arange(BB)                                   # [BB]
    child_node = jnp.repeat(node_id, C)                        # [BB*C]
    rep = (child_node[:, None] == node_id[None, :]).astype(jnp.float32)  # [BB*C, BB]
    segsum = rep.T * (0.5 / C)                                 # [BB, BB*C], scale folded

    return {
        "w1": params["w1"], "b1": params["b1"],
        "w2c": params["w2c"], "w2p": params["w2p"], "b2": params["b2"],
        "w3p_pad": w3p_pad, "w3t_pad": w3t_pad, "b3_pad": b3_pad,
        "rep": rep, "segsum": segsum,
    }


# ------------------------------- wrapper --------------------------------------
def combined_net_forward(parent_vecs, children_features, target_features, prep):
    """parent_vecs: [B, H], children_features: [B, C, F], target_features: [B, T].
    `prep` is the output of prepare_params (built once, outside the hot path)."""
    b = parent_vecs.shape[0]
    assert b % BB == 0, "batch must be a multiple of the node tile BB"

    parent = parent_vecs.astype(jnp.float32)                             # [B, H]
    children = children_features.reshape(b * C, F).astype(jnp.float32)   # [B*C, F]
    target = target_features.astype(jnp.float32)                         # [B, T]

    const = lambda i: (0, 0)   # weights / rep matrices: resident across steps

    new_children_flat, logits_pad = pl.pallas_call(
        combined_net_kernel,
        out_shape=(
            jax.ShapeDtypeStruct((b * C, H), jnp.float32),   # updated child reps
            jax.ShapeDtypeStruct((b, NC_PAD), jnp.float32),  # lane-padded logits
        ),
        grid_spec=pltpu.PrefetchScalarGridSpec(
            num_scalar_prefetch=0,
            grid=(b // BB,),                                  # (1,) at B=64
            in_specs=[
                pl.BlockSpec((BB, H), lambda i: (i, 0)),          # parent tile
                pl.BlockSpec((BB * C, F), lambda i: (i, 0)),      # children tile
                pl.BlockSpec((BB, T), lambda i: (i, 0)),          # target tile
                pl.BlockSpec((F, H), const),                      # w1
                pl.BlockSpec((1, H), const),                      # b1
                pl.BlockSpec((H, H), const),                      # w2c
                pl.BlockSpec((H, H), const),                      # w2p
                pl.BlockSpec((1, H), const),                      # b2
                pl.BlockSpec((H, NC_PAD), const),                 # w3p (padded)
                pl.BlockSpec((T, NC_PAD), const),                 # w3t (padded)
                pl.BlockSpec((1, NC_PAD), const),                 # b3  (padded)
                pl.BlockSpec((BB * C, BB), const),                # rep (0/1)
                pl.BlockSpec((BB, BB * C), const),                # segsum (0.5/C folded)
            ],
            out_specs=[
                pl.BlockSpec((BB * C, H), lambda i: (i, 0)),
                pl.BlockSpec((BB, NC_PAD), lambda i: (i, 0)),
            ],
        ),
        compiler_params=pltpu.CompilerParams(
            dimension_semantics=("arbitrary",),      # single step at B=64; steps are
                                                     # independent if B grows anyway
            vmem_limit_bytes=32 * 1024 * 1024,
        ),
    )(parent, children, target,
      prep["w1"], prep["b1"], prep["w2c"], prep["w2p"], prep["b2"],
      prep["w3p_pad"], prep["w3t_pad"], prep["b3_pad"],
      prep["rep"], prep["segsum"])

    new_children = new_children_flat.reshape(b, C, H)   # contiguous reshape (free)
    logits = logits_pad[:, :NC]                         # drop lane padding (one cheap slice)
    return new_children, logits


# --------------------------- deterministic params ------------------------------
def make_params():
    keys = jax.random.split(jax.random.PRNGKey(42), 8)

    def init(k, shape, fan_in):
        return (jax.random.normal(k, shape, dtype=jnp.float32)
                * (1.0 / jnp.sqrt(jnp.float32(fan_in))))

    return {
        # child / container embed net
        "w1":  init(keys[0], (F, H), F),
        "b1":  0.1 * jax.random.normal(keys[5], (1, H), dtype=jnp.float32),
        # edge embed net (concat weight split: child part + parent part)
        "w2c": init(keys[1], (H, H), 2 * H),
        "w2p": init(keys[2], (H, H), 2 * H),
        "b2":  0.1 * jax.random.normal(keys[6], (1, H), dtype=jnp.float32),
        # classification net (concat weight split: parent part + target part)
        "w3p": init(keys[3], (H, NC), H + T),
        "w3t": init(keys[4], (T, NC), H + T),
        "b3":  0.1 * jax.random.normal(keys[7], (1, NC), dtype=jnp.float32),
    }


# ------------------------------ reference (pure JAX) ---------------------------
def reference_forward(parent_vecs, children_features, target_features, p):
    cv = jnp.maximum(
        jnp.einsum("bcf,fh->bch", children_features, p["w1"]) + p["b1"], 0.0)
    nch = jnp.maximum(
        jnp.einsum("bch,hk->bck", cv, p["w2c"])
        + (parent_vecs @ p["w2p"])[:, None, :] + p["b2"], 0.0)
    new_parent = jnp.mean(nch, axis=1) * 0.5 + parent_vecs * 0.5
    logits = new_parent @ p["w3p"] + target_features @ p["w3t"] + p["b3"]
    return nch, logits


# ----------------------------------- main --------------------------------------
if __name__ == "__main__":
    key = jax.random.PRNGKey(0)
    k_parent, k_children, k_target = jax.random.split(key, 3)

    parent_vecs = jax.random.normal(k_parent, (B, H), dtype=jnp.float32)
    children_features = jax.random.normal(k_children, (B, C, F), dtype=jnp.float32)
    target_features = jax.random.normal(k_target, (B, T), dtype=jnp.float32)

    params = make_params()
    prep = prepare_params(params)   # one-time; hoisted out of the per-call path

    fwd = jax.jit(combined_net_forward)
    new_children, logits = fwd(parent_vecs, children_features, target_features, prep)
    jax.block_until_ready((new_children, logits))

    # correctness check against pure-JAX reference
    ref_children, ref_logits = reference_forward(
        parent_vecs, children_features, target_features, params)
    assert new_children.shape == (B, C, H) and logits.shape == (B, NC)
    assert jnp.allclose(new_children, ref_children, atol=5e-4, rtol=5e-4)
    assert jnp.allclose(logits, ref_logits, atol=5e-4, rtol=5e-4)

    print("KERNEL_OK")
</pallas_src>

<mosaic_0001>
module attributes {stable_mosaic.version = 11 : i64} {
  func.func @combined_net_kernel(%arg0: i32, %arg1: memref<64x32xf32, #tpu.memory_space<vmem>>, %arg2: memref<512x32xf32, #tpu.memory_space<vmem>>, %arg3: memref<64x16xf32, #tpu.memory_space<vmem>>, %arg4: memref<32x32xf32, #tpu.memory_space<vmem>>, %arg5: memref<1x32xf32, #tpu.memory_space<vmem>>, %arg6: memref<32x32xf32, #tpu.memory_space<vmem>>, %arg7: memref<32x32xf32, #tpu.memory_space<vmem>>, %arg8: memref<1x32xf32, #tpu.memory_space<vmem>>, %arg9: memref<32x128xf32, #tpu.memory_space<vmem>>, %arg10: memref<16x128xf32, #tpu.memory_space<vmem>>, %arg11: memref<1x128xf32, #tpu.memory_space<vmem>>, %arg12: memref<512x64xf32, #tpu.memory_space<vmem>>, %arg13: memref<64x512xf32, #tpu.memory_space<vmem>>, %arg14: memref<512x32xf32, #tpu.memory_space<vmem>>, %arg15: memref<64x128xf32, #tpu.memory_space<vmem>>) attributes {dimension_semantics = [#tpu.dimension_semantics<arbitrary>], iteration_bounds = array<i64: 1>, scalar_prefetch = 0 : i64, scratch_operands = 0 : i64, tpu.core_type = #tpu.core_type<tc>, window_params = [{transform_indices = @transform_0, window_bounds = array<i64: 64, 32>}, {transform_indices = @transform_1, window_bounds = array<i64: 512, 32>}, {transform_indices = @transform_2, window_bounds = array<i64: 64, 16>}, {pipeline_mode = #tpu.pipeline_mode<synchronous>, transform_indices = @transform_3, window_bounds = array<i64: 32, 32>}, {pipeline_mode = #tpu.pipeline_mode<synchronous>, transform_indices = @transform_4, window_bounds = array<i64: 1, 32>}, {pipeline_mode = #tpu.pipeline_mode<synchronous>, transform_indices = @transform_5, window_bounds = array<i64: 32, 32>}, {pipeline_mode = #tpu.pipeline_mode<synchronous>, transform_indices = @transform_6, window_bounds = array<i64: 32, 32>}, {pipeline_mode = #tpu.pipeline_mode<synchronous>, transform_indices = @transform_7, window_bounds = array<i64: 1, 32>}, {pipeline_mode = #tpu.pipeline_mode<synchronous>, transform_indices = @transform_8, window_bounds = array<i64: 32, 128>}, {pipeline_mode = #tpu.pipeline_mode<synchronous>, transform_indices = @transform_9, window_bounds = array<i64: 16, 128>}, {pipeline_mode = #tpu.pipeline_mode<synchronous>, transform_indices = @transform_10, window_bounds = array<i64: 1, 128>}, {pipeline_mode = #tpu.pipeline_mode<synchronous>, transform_indices = @transform_11, window_bounds = array<i64: 512, 64>}, {pipeline_mode = #tpu.pipeline_mode<synchronous>, transform_indices = @transform_12, window_bounds = array<i64: 64, 512>}, {transform_indices = @transform_13, window_bounds = array<i64: 512, 32>}, {transform_indices = @transform_14, window_bounds = array<i64: 64, 128>}]} {
    %c0 = arith.constant 0 : index
    %c0_0 = arith.constant 0 : index
    %0 = vector.load %arg1[%c0, %c0_0] : memref<64x32xf32, #tpu.memory_space<vmem>>, vector<64x32xf32>
    %c0_1 = arith.constant 0 : index
    %c0_2 = arith.constant 0 : index
    %1 = vector.load %arg2[%c0_1, %c0_2] : memref<512x32xf32, #tpu.memory_space<vmem>>, vector<512x32xf32>
    %c0_3 = arith.constant 0 : index
    %c0_4 = arith.constant 0 : index
    %2 = vector.load %arg3[%c0_3, %c0_4] : memref<64x16xf32, #tpu.memory_space<vmem>>, vector<64x16xf32>
    %c0_5 = arith.constant 0 : index
    %c0_6 = arith.constant 0 : index
    %3 = vector.load %arg4[%c0_5, %c0_6] : memref<32x32xf32, #tpu.memory_space<vmem>>, vector<32x32xf32>
    %cst = arith.constant dense<0.000000e+00> : vector<512x32xf32>
    %4 = tpu.matmul %1, %3, %cst {dimension_numbers = #tpu.dot_dimension_numbers<[1], [0], [0], [1], [0, 0, 1, 1], [], []>} : vector<512x32xf32>, vector<32x32xf32>, vector<512x32xf32> -> vector<512x32xf32>
    %c0_7 = arith.constant 0 : index
    %c0_8 = arith.constant 0 : index
    %5 = vector.load %arg5[%c0_7, %c0_8] : memref<1x32xf32, #tpu.memory_space<vmem>>, vector<1x32xf32>
    %6 = vector.broadcast %5 : vector<1x32xf32> to vector<512x32xf32>
    %7 = arith.addf %4, %6 : vector<512x32xf32>
    %cst_9 = arith.constant 0.000000e+00 : f32
    %8 = vector.broadcast %cst_9 : f32 to vector<512x32xf32>
    %9 = arith.maximumf %7, %8 : vector<512x32xf32>
    %c0_10 = arith.constant 0 : index
    %c0_11 = arith.constant 0 : index
    %10 = vector.load %arg7[%c0_10, %c0_11] : memref<32x32xf32, #tpu.memory_space<vmem>>, vector<32x32xf32>
    %cst_12 = arith.constant dense<0.000000e+00> : vector<64x32xf32>
    %11 = tpu.matmul %0, %10, %cst_12 {dimension_numbers = #tpu.dot_dimension_numbers<[1], [0], [0], [1], [0, 0, 1, 1], [], []>} : vector<64x32xf32>, vector<32x32xf32>, vector<64x32xf32> -> vector<64x32xf32>
    %c0_13 = arith.constant 0 : index
    %c0_14 = arith.constant 0 : index
    %12 = vector.load %arg12[%c0_13, %c0_14] : memref<512x64xf32, #tpu.memory_space<vmem>>, vector<512x64xf32>
    %cst_15 = arith.constant dense<0.000000e+00> : vector<512x32xf32>
    %13 = tpu.matmul %12, %11, %cst_15 {dimension_numbers = #tpu.dot_dimension_numbers<[1], [0], [0], [1], [0, 0, 1, 1], [], []>} : vector<512x64xf32>, vector<64x32xf32>, vector<512x32xf32> -> vector<512x32xf32>
    %c0_16 = arith.constant 0 : index
    %c0_17 = arith.constant 0 : index
    %14 = vector.load %arg6[%c0_16, %c0_17] : memref<32x32xf32, #tpu.memory_space<vmem>>, vector<32x32xf32>
    %cst_18 = arith.constant dense<0.000000e+00> : vector<512x32xf32>
    %15 = tpu.matmul %9, %14, %cst_18 {dimension_numbers = #tpu.dot_dimension_numbers<[1], [0], [0], [1], [0, 0, 1, 1], [], []>} : vector<512x32xf32>, vector<32x32xf32>, vector<512x32xf32> -> vector<512x32xf32>
    %16 = arith.addf %15, %13 : vector<512x32xf32>
    %c0_19 = arith.constant 0 : index
    %c0_20 = arith.constant 0 : index
    %17 = vector.load %arg8[%c0_19, %c0_20] : memref<1x32xf32, #tpu.memory_space<vmem>>, vector<1x32xf32>
    %18 = vector.broadcast %17 : vector<1x32xf32> to vector<512x32xf32>
    %19 = arith.addf %16, %18 : vector<512x32xf32>
    %cst_21 = arith.constant 0.000000e+00 : f32
    %20 = vector.broadcast %cst_21 : f32 to vector<512x32xf32>
    %21 = arith.maximumf %19, %20 : vector<512x32xf32>
    %c0_22 = arith.constant 0 : index
    %c0_23 = arith.constant 0 : index
    %22 = vector.load %arg14[%c0_22, %c0_23] : memref<512x32xf32, #tpu.memory_space<vmem>>, vector<512x32xf32>
    tpu.vector_store %arg14[%c0_22, %c0_23], %21 {strides = array<i32>} : memref<512x32xf32, #tpu.memory_space<vmem>>, vector<512x32xf32>,
    %c0_24 = arith.constant 0 : index
    %c0_25 = arith.constant 0 : index
    %23 = vector.load %arg13[%c0_24, %c0_25] : memref<64x512xf32, #tpu.memory_space<vmem>>, vector<64x512xf32>
    %cst_26 = arith.constant dense<0.000000e+00> : vector<64x32xf32>
    %24 = tpu.matmul %23, %21, %cst_26 {dimension_numbers = #tpu.dot_dimension_numbers<[1], [0], [0], [1], [0, 0, 1, 1], [], []>} : vector<64x512xf32>, vector<512x32xf32>, vector<64x32xf32> -> vector<64x32xf32>
    %cst_27 = arith.constant 5.000000e-01 : f32
    %25 = vector.broadcast %cst_27 : f32 to vector<64x32xf32>
    %26 = arith.mulf %0, %25 : vector<64x32xf32>
    %27 = arith.addf %24, %26 : vector<64x32xf32>
    %c0_28 = arith.constant 0 : index
    %c0_29 = arith.constant 0 : index
    %28 = vector.load %arg9[%c0_28, %c0_29] : memref<32x128xf32, #tpu.memory_space<vmem>>, vector<32x128xf32>
    %cst_30 = arith.constant dense<0.000000e+00> : vector<64x128xf32>
    %29 = tpu.matmul %27, %28, %cst_30 {dimension_numbers = #tpu.dot_dimension_numbers<[1], [0], [0], [1], [0, 0, 1, 1], [], []>} : vector<64x32xf32>, vector<32x128xf32>, vector<64x128xf32> -> vector<64x128xf32>
    %c0_31 = arith.constant 0 : index
    %c0_32 = arith.constant 0 : index
    %30 = vector.load %arg10[%c0_31, %c0_32] : memref<16x128xf32, #tpu.memory_space<vmem>>, vector<16x128xf32>
    %cst_33 = arith.constant dense<0.000000e+00> : vector<64x128xf32>
    %31 = tpu.matmul %2, %30, %cst_33 {dimension_numbers = #tpu.dot_dimension_numbers<[1], [0], [0], [1], [0, 0, 1, 1], [], []>} : vector<64x16xf32>, vector<16x128xf32>, vector<64x128xf32> -> vector<64x128xf32>
    %32 = arith.addf %29, %31 : vector<64x128xf32>
    %c0_34 = arith.constant 0 : index
    %c0_35 = arith.constant 0 : index
    %33 = vector.load %arg11[%c0_34, %c0_35] : memref<1x128xf32, #tpu.memory_space<vmem>>, vector<1x128xf32>
    %34 = vector.broadcast %33 : vector<1x128xf32> to vector<64x128xf32>
    %35 = arith.addf %32, %34 : vector<64x128xf32>
    %c0_36 = arith.constant 0 : index
    %c0_37 = arith.constant 0 : index
    %36 = vector.load %arg15[%c0_36, %c0_37] : memref<64x128xf32, #tpu.memory_space<vmem>>, vector<64x128xf32>
    tpu.vector_store %arg15[%c0_36, %c0_37], %35 {strides = array<i32>} : memref<64x128xf32, #tpu.memory_space<vmem>>, vector<64x128xf32>,
    return
  }
  func.func @transform_0(%arg0: i32) -> (i32, i32) {
    %c0_i32 = arith.constant 0 : i32
    %c0_i32_0 = arith.constant 0 : i32
    return %arg0, %c0_i32 : i32, i32
  }
  func.func @transform_1(%arg0: i32) -> (i32, i32) {
    %c0_i32 = arith.constant 0 : i32
    %c0_i32_0 = arith.constant 0 : i32
    return %arg0, %c0_i32 : i32, i32
  }
  func.func @transform_2(%arg0: i32) -> (i32, i32) {
    %c0_i32 = arith.constant 0 : i32
    %c0_i32_0 = arith.constant 0 : i32
    return %arg0, %c0_i32 : i32, i32
  }
  func.func @transform_3(%arg0: i32) -> (i32, i32) {
    %c0_i32 = arith.constant 0 : i32
    %c0_i32_0 = arith.constant 0 : i32
    %c0_i32_1 = arith.constant 0 : i32
    return %c0_i32, %c0_i32_0 : i32, i32
  }
  func.func @transform_4(%arg0: i32) -> (i32, i32) {
    %c0_i32 = arith.constant 0 : i32
    %c0_i32_0 = arith.constant 0 : i32
    %c0_i32_1 = arith.constant 0 : i32
    return %c0_i32, %c0_i32_0 : i32, i32
  }
  func.func @transform_5(%arg0: i32) -> (i32, i32) {
    %c0_i32 = arith.constant 0 : i32
    %c0_i32_0 = arith.constant 0 : i32
    %c0_i32_1 = arith.constant 0 : i32
    return %c0_i32, %c0_i32_0 : i32, i32
  }
  func.func @transform_6(%arg0: i32) -> (i32, i32) {
    %c0_i32 = arith.constant 0 : i32
    %c0_i32_0 = arith.constant 0 : i32
    %c0_i32_1 = arith.constant 0 : i32
    return %c0_i32, %c0_i32_0 : i32, i32
  }
  func.func @transform_7(%arg0: i32) -> (i32, i32) {
    %c0_i32 = arith.constant 0 : i32
    %c0_i32_0 = arith.constant 0 : i32
    %c0_i32_1 = arith.constant 0 : i32
    return %c0_i32, %c0_i32_0 : i32, i32
  }
  func.func @transform_8(%arg0: i32) -> (i32, i32) {
    %c0_i32 = arith.constant 0 : i32
    %c0_i32_0 = arith.constant 0 : i32
    %c0_i32_1 = arith.constant 0 : i32
    return %c0_i32, %c0_i32_0 : i32, i32
  }
  func.func @transform_9(%arg0: i32) -> (i32, i32) {
    %c0_i32 = arith.constant 0 : i32
    %c0_i32_0 = arith.constant 0 : i32
    %c0_i32_1 = arith.constant 0 : i32
    return %c0_i32, %c0_i32_0 : i32, i32
  }
  func.func @transform_10(%arg0: i32) -> (i32, i32) {
    %c0_i32 = arith.constant 0 : i32
    %c0_i32_0 = arith.constant 0 : i32
    %c0_i32_1 = arith.constant 0 : i32
    return %c0_i32, %c0_i32_0 : i32, i32
  }
  func.func @transform_11(%arg0: i32) -> (i32, i32) {
    %c0_i32 = arith.constant 0 : i32
    %c0_i32_0 = arith.constant 0 : i32
    %c0_i32_1 = arith.constant 0 : i32
    return %c0_i32, %c0_i32_0 : i32, i32
  }
  func.func @transform_12(%arg0: i32) -> (i32, i32) {
    %c0_i32 = arith.constant 0 : i32
    %c0_i32_0 = arith.constant 0 : i32
    %c0_i32_1 = arith.constant 0 : i32
    return %c0_i32, %c0_i32_0 : i32, i32
  }
  func.func @transform_13(%arg0: i32) -> (i32, i32) {
    %c0_i32 = arith.constant 0 : i32
    %c0_i32_0 = arith.constant 0 : i32
    return %arg0, %c0_i32 : i32, i32
  }
  func.func @transform_14(%arg0: i32) -> (i32, i32) {
    %c0_i32 = arith.constant 0 : i32
    %c0_i32_0 = arith.constant 0 : i32
    return %arg0, %c0_i32 : i32, i32
  }
}

</mosaic_0001>

<llo_original>
// kernel: combined_net_forward.1
$region0: #{combined_net_forward.1}
  #allocation0 [shape = 'u32[]', space=smem, size = 0x4, offset = 0x4, fixed_abs, tag = 'smem constant byte address 0x4 - core index']
  #allocation1 [shape = 'u32[144,128]{1,0:T(1,128)}', space=vmem, size = 0x12000, scoped, tag = 'internal scratch']
  %s0 = inlined_call_operand.vmem [shape: f32[64,32], index: 0, kind: input, shape index: {}]
  %s1 = inlined_call_operand.vmem [shape: f32[512,32], index: 1, kind: input, shape index: {}]
  %s2 = inlined_call_operand.vmem [shape: f32[64,16], index: 2, kind: input, shape index: {}]
  %s3 = inlined_call_operand.vmem [shape: f32[32,32], index: 3, kind: input, shape index: {}]
  %s4 = inlined_call_operand.vmem [shape: f32[1,32], index: 4, kind: input, shape index: {}]
  %s5 = inlined_call_operand.vmem [shape: f32[32,32], index: 5, kind: input, shape index: {}]
  %s6 = inlined_call_operand.vmem [shape: f32[32,32], index: 6, kind: input, shape index: {}]
  %s7 = inlined_call_operand.vmem [shape: f32[1,32], index: 7, kind: input, shape index: {}]
  %s8 = inlined_call_operand.vmem [shape: f32[32,128], index: 8, kind: input, shape index: {}]
  %s9 = inlined_call_operand.vmem [shape: f32[16,128], index: 9, kind: input, shape index: {}]
  %s10 = inlined_call_operand.vmem [shape: f32[1,128], index: 10, kind: input, shape index: {}]
  %s11 = inlined_call_operand.vmem [shape: f32[512,64], index: 11, kind: input, shape index: {}]
  %s12 = inlined_call_operand.vmem [shape: f32[64,512], index: 12, kind: input, shape index: {}]
  %s13 = inlined_call_operand.vmem [shape: f32[512,32], index: 13, kind: output, shape index: {0}]
  %s14 = inlined_call_operand.vmem [shape: f32[64,128], index: 14, kind: output, shape index: {1}]
  %15 = xla_tuple %s13, %s14
  %s16 = sld [smem:[#allocation0]]
  $region70: #{combined_net_forward.1} parent=0
    _
  %s18 = ssub.s32 1, %s16
  %s19 = scalar_select 0, %s18, %s16
  // Predicated region
  $region2: #{combined_net_forward.1} parent=0 // pred_check
    _
  $region3: #{combined_net_forward.1} parent=0 // pred_check_branch
    %21 = sbr.rel (0) target = $region5
  $region4: #{combined_net_forward.1} parent=0 // pred_region
    _
  $region5: #{combined_net_forward.1} parent=0 // pred_fallthru
    _
  // Predicated region
  $region6: #{combined_net_forward.1} parent=0 // pred_check
    _
  $region7: #{combined_net_forward.1} parent=0 // pred_check_branch
    %23 = sbr.rel (0) target = $region9
  $region8: #{combined_net_forward.1} parent=0 // pred_region
    _
  $region9: #{combined_net_forward.1} parent=0 // pred_fallthru
    _
  // Predicated region
  $region10: #{combined_net_forward.1} parent=0 // pred_check
    _
  $region11: #{combined_net_forward.1} parent=0 // pred_check_branch
    %25 = sbr.rel (0) target = $region13
  $region12: #{combined_net_forward.1} parent=0 // pred_region
    _
  $region13: #{combined_net_forward.1} parent=0 // pred_fallthru
    _
  // Predicated region
  $region14: #{combined_net_forward.1} parent=0 // pred_check
    _
  $region15: #{combined_net_forward.1} parent=0 // pred_check_branch
    %27 = sbr.rel (0) target = $region17
  $region16: #{combined_net_forward.1} parent=0 // pred_region
    _
  $region17: #{combined_net_forward.1} parent=0 // pred_fallthru
    _
  // Predicated region
  $region18: #{combined_net_forward.1} parent=0 // pred_check
    _
  $region19: #{combined_net_forward.1} parent=0 // pred_check_branch
    %29 = sbr.rel (0) target = $region21
  $region20: #{combined_net_forward.1} parent=0 // pred_region
    _
  $region21: #{combined_net_forward.1} parent=0 // pred_fallthru
    _
  // Predicated region
  $region22: #{combined_net_forward.1} parent=0 // pred_check
    _
  $region23: #{combined_net_forward.1} parent=0 // pred_check_branch
    %31 = sbr.rel (0) target = $region25
  $region24: #{combined_net_forward.1} parent=0 // pred_region
    _
  $region25: #{combined_net_forward.1} parent=0 // pred_fallthru
    _
  // Predicated region
  $region26: #{combined_net_forward.1} parent=0 // pred_check
    _
  $region27: #{combined_net_forward.1} parent=0 // pred_check_branch
    %33 = sbr.rel (0) target = $region29
  $region28: #{combined_net_forward.1} parent=0 // pred_region
    _
  $region29: #{combined_net_forward.1} parent=0 // pred_fallthru
    _
  // Predicated region
  $region30: #{combined_net_forward.1} parent=0 // pred_check
    _
  $region31: #{combined_net_forward.1} parent=0 // pred_check_branch
    %35 = sbr.rel (0) target = $region33
  $region32: #{combined_net_forward.1} parent=0 // pred_region
    _
  $region33: #{combined_net_forward.1} parent=0 // pred_fallthru
    _
  // Predicated region
  $region34: #{combined_net_forward.1} parent=0 // pred_check
    _
  $region35: #{combined_net_forward.1} parent=0 // pred_check_branch
    %37 = sbr.rel (0) target = $region37
  $region36: #{combined_net_forward.1} parent=0 // pred_region
    _
  $region37: #{combined_net_forward.1} parent=0 // pred_fallthru
    _
  // Predicated region
  $region38: #{combined_net_forward.1} parent=0 // pred_check
    _
  $region39: #{combined_net_forward.1} parent=0 // pred_check_branch
    %39 = sbr.rel (0) target = $region41
  $region40: #{combined_net_forward.1} parent=0 // pred_region
    _
  $region41: #{combined_net_forward.1} parent=0 // pred_fallthru
    _
  // Predicated region
  $region42: #{combined_net_forward.1} parent=0 // pred_check
    _
  $region43: #{combined_net_forward.1} parent=0 // pred_check_branch
    %41 = sbr.rel (0) target = $region45
  $region44: #{combined_net_forward.1} parent=0 // pred_region
    _
  $region45: #{combined_net_forward.1} parent=0 // pred_fallthru
    _
  // Predicated region
  $region46: #{combined_net_forward.1} parent=0 // pred_check
    _
  $region47: #{combined_net_forward.1} parent=0 // pred_check_branch
    %43 = sbr.rel (0) target = $region49
  $region48: #{combined_net_forward.1} parent=0 // pred_region
    _
  $region49: #{combined_net_forward.1} parent=0 // pred_fallthru
    _
  // Predicated region
  $region50: #{combined_net_forward.1} parent=0 // pred_check
    _
  $region51: #{combined_net_forward.1} parent=0 // pred_check_branch
    %45 = sbr.rel (0) target = $region53
  $region52: #{combined_net_forward.1} parent=0 // pred_region
    _
  $region53: #{combined_net_forward.1} parent=0 // pred_fallthru
    _
  %v46 = vld [vmem:[%s0] sm:$0xff]
  %v47 = vld [vmem:[%s0 + $0x8] sm:$0xff]
  %v48 = vld [vmem:[%s0 + $0x10] sm:$0xff]
  %v49 = vld [vmem:[%s0 + $0x18] sm:$0xff]
  %v50 = vld [vmem:[%s0 + $0x20] sm:$0xff]
  %v51 = vld [vmem:[%s0 + $0x28] sm:$0xff]
  %v52 = vld [vmem:[%s0 + $0x30] sm:$0xff]
  %v53 = vld [vmem:[%s0 + $0x38] sm:$0xff]
  %v54 = vld [vmem:[%s1] sm:$0xff]
  %v55 = vld [vmem:[%s1 + $0x8] sm:$0xff]
  %v56 = vld [vmem:[%s1 + $0x10] sm:$0xff]
  %v57 = vld [vmem:[%s1 + $0x18] sm:$0xff]
  %v58 = vld [vmem:[%s1 + $0x20] sm:$0xff]
  %v59 = vld [vmem:[%s1 + $0x28] sm:$0xff]
  %v60 = vld [vmem:[%s1 + $0x30] sm:$0xff]
  %v61 = vld [vmem:[%s1 + $0x38] sm:$0xff]
  %v62 = vld [vmem:[%s1 + $0x40] sm:$0xff]
  %v63 = vld [vmem:[%s1 + $0x48] sm:$0xff]
  %v64 = vld [vmem:[%s1 + $0x50] sm:$0xff]
  %v65 = vld [vmem:[%s1 + $0x58] sm:$0xff]
  %v66 = vld [vmem:[%s1 + $0x60] sm:$0xff]
  %v67 = vld [vmem:[%s1 + $0x68] sm:$0xff]
  %v68 = vld [vmem:[%s1 + $0x70] sm:$0xff]
  %v69 = vld [vmem:[%s1 + $0x78] sm:$0xff]
  %v70 = vld [vmem:[%s1 + $0x80] sm:$0xff]
  %v71 = vld [vmem:[%s1 + $0x88] sm:$0xff]
  %v72 = vld [vmem:[%s1 + $0x90] sm:$0xff]
  %v73 = vld [vmem:[%s1 + $0x98] sm:$0xff]
  %v74 = vld [vmem:[%s1 + $0xa0] sm:$0xff]
  %v75 = vld [vmem:[%s1 + $0xa8] sm:$0xff]
  %v76 = vld [vmem:[%s1 + $0xb0] sm:$0xff]
  %v77 = vld [vmem:[%s1 + $0xb8] sm:$0xff]
  %v78 = vld [vmem:[%s1 + $0xc0] sm:$0xff]
  %v79 = vld [vmem:[%s1 + $0xc8] sm:$0xff]
  %v80 = vld [vmem:[%s1 + $0xd0] sm:$0xff]
  %v81 = vld [vmem:[%s1 + $0xd8] sm:$0xff]
  %v82 = vld [vmem:[%s1 + $0xe0] sm:$0xff]
  %v83 = vld [vmem:[%s1 + $0xe8] sm:$0xff]
  %v84 = vld [vmem:[%s1 + $0xf0] sm:$0xff]
  %v85 = vld [vmem:[%s1 + $0xf8] sm:$0xff]
  %v86 = vld [vmem:[%s1 + $0x100] sm:$0xff]
  %v87 = vld [vmem:[%s1 + $0x108] sm:$0xff]
  %v88 = vld [vmem:[%s1 + $0x110] sm:$0xff]
  %v89 = vld [vmem:[%s1 + $0x118] sm:$0xff]
  %v90 = vld [vmem:[%s1 + $0x120] sm:$0xff]
  %v91 = vld [vmem:[%s1 + $0x128] sm:$0xff]
  %v92 = vld [vmem:[%s1 + $0x130] sm:$0xff]
  %v93 = vld [vmem:[%s1 + $0x138] sm:$0xff]
  %v94 = vld [vmem:[%s1 + $0x140] sm:$0xff]
  %v95 = vld [vmem:[%s1 + $0x148] sm:$0xff]
  %v96 = vld [vmem:[%s1 + $0x150] sm:$0xff]
  %v97 = vld [vmem:[%s1 + $0x158] sm:$0xff]
  %v98 = vld [vmem:[%s1 + $0x160] sm:$0xff]
  %v99 = vld [vmem:[%s1 + $0x168] sm:$0xff]
  %v100 = vld [vmem:[%s1 + $0x170] sm:$0xff]
  %v101 = vld [vmem:[%s1 + $0x178] sm:$0xff]
  %v102 = vld [vmem:[%s1 + $0x180] sm:$0xff]
  %v103 = vld [vmem:[%s1 + $0x188] sm:$0xff]
  %v104 = vld [vmem:[%s1 + $0x190] sm:$0xff]
  %v105 = vld [vmem:[%s1 + $0x198] sm:$0xff]
  %v106 = vld [vmem:[%s1 + $0x1a0] sm:$0xff]
  %v107 = vld [vmem:[%s1 + $0x1a8] sm:$0xff]
  %v108 = vld [vmem:[%s1 + $0x1b0] sm:$0xff]
  %v109 = vld [vmem:[%s1 + $0x1b8] sm:$0xff]
  %v110 = vld [vmem:[%s1 + $0x1c0] sm:$0xff]
  %v111 = vld [vmem:[%s1 + $0x1c8] sm:$0xff]
  %v112 = vld [vmem:[%s1 + $0x1d0] sm:$0xff]
  %v113 = vld [vmem:[%s1 + $0x1d8] sm:$0xff]
  %v114 = vld [vmem:[%s1 + $0x1e0] sm:$0xff]
  %v115 = vld [vmem:[%s1 + $0x1e8] sm:$0xff]
  %v116 = vld [vmem:[%s1 + $0x1f0] sm:$0xff]
  %v117 = vld [vmem:[%s1 + $0x1f8] sm:$0xff]
  %v118 = vld [vmem:[%s2] sm:$0xff]
  %v119 = vld [vmem:[%s2 + $0x8] sm:$0xff]
  %v120 = vld [vmem:[%s2 + $0x10] sm:$0xff]
  %v121 = vld [vmem:[%s2 + $0x18] sm:$0xff]
  %v122 = vld [vmem:[%s2 + $0x20] sm:$0xff]
  %v123 = vld [vmem:[%s2 + $0x28] sm:$0xff]
  %v124 = vld [vmem:[%s2 + $0x30] sm:$0xff]
  %v125 = vld [vmem:[%s2 + $0x38] sm:$0xff]
  %v126 = vld [vmem:[%s3] sm:$0xff]
  %v127 = vld [vmem:[%s3 + $0x8] sm:$0xff]
  %v128 = vld [vmem:[%s3 + $0x10] sm:$0xff]
  %v129 = vld [vmem:[%s3 + $0x18] sm:$0xff]
  %v130 = vld [vmem:[%s4] sm:$0x1]
  %v132 = vlaneseq
  %v133 = vshrl.u32 %v132, 7
  %v134 = vsub.s32 0, %v133
  %v135 = vrot.slane %v130, %v134
  %vm137 = vcmask 261120
  %v139 = vsel %vm137, %v54, 0
  %v142 = vsel %vm137, %v55, 0
  %v145 = vsel %vm137, %v56, 0
  %v148 = vsel %vm137, %v57, 0
  %v151 = vsel %vm137, %v58, 0
  %v154 = vsel %vm137, %v59, 0
  %v157 = vsel %vm137, %v60, 0
  %v160 = vsel %vm137, %v61, 0
  %v163 = vsel %vm137, %v62, 0
  %v166 = vsel %vm137, %v63, 0
  %v169 = vsel %vm137, %v64, 0
  %v172 = vsel %vm137, %v65, 0
  %v175 = vsel %vm137, %v66, 0
  %v178 = vsel %vm137, %v67, 0
  %v181 = vsel %vm137, %v68, 0
  %v184 = vsel %vm137, %v69, 0
  %v187 = vsel %vm137, %v70, 0
  %v190 = vsel %vm137, %v71, 0
  %v193 = vsel %vm137, %v72, 0
  %v196 = vsel %vm137, %v73, 0
  %v199 = vsel %vm137, %v74, 0
  %v202 = vsel %vm137, %v75, 0
  %v205 = vsel %vm137, %v76, 0
  %v208 = vsel %vm137, %v77, 0
  %v211 = vsel %vm137, %v78, 0
  %v214 = vsel %vm137, %v79, 0
  %v217 = vsel %vm137, %v80, 0
  %v220 = vsel %vm137, %v81, 0
  %v223 = vsel %vm137, %v82, 0
  %v226 = vsel %vm137, %v83, 0
  %v229 = vsel %vm137, %v84, 0
  %v232 = vsel %vm137, %v85, 0
  %v235 = vsel %vm137, %v86, 0
  %v238 = vsel %vm137, %v87, 0
  %v241 = vsel %vm137, %v88, 0
  %v244 = vsel %vm137, %v89, 0
  %v247 = vsel %vm137, %v90, 0
  %v250 = vsel %vm137, %v91, 0
  %v253 = vsel %vm137, %v92, 0
  %v256 = vsel %vm137, %v93, 0
  %v259 = vsel %vm137, %v94, 0
  %v262 = vsel %vm137, %v95, 0
  %v265 = vsel %vm137, %v96, 0
  %v268 = vsel %vm137, %v97, 0
  %v271 = vsel %vm137, %v98, 0
  %v274 = vsel %vm137, %v99, 0
  %v277 = vsel %vm137, %v100, 0
  %v280 = vsel %vm137, %v101, 0
  %v283 = vsel %vm137, %v102, 0
  %v286 = vsel %vm137, %v103, 0
  %v289 = vsel %vm137, %v104, 0
  %v292 = vsel %vm137, %v105, 0
  %v295 = vsel %vm137, %v106, 0
  %v298 = vsel %vm137, %v107, 0
  %v301 = vsel %vm137, %v108, 0
  %v304 = vsel %vm137, %v109, 0
  %v307 = vsel %vm137, %v110, 0
  %v310 = vsel %vm137, %v111, 0
  %v313 = vsel %vm137, %v112, 0
  %v316 = vsel %vm137, %v113, 0
  %v319 = vsel %vm137, %v114, 0
  %v322 = vsel %vm137, %v115, 0
  %v325 = vsel %vm137, %v116, 0
  %v328 = vsel %vm137, %v117, 0
  %330 = vmatprep.subr.mxu0 0.0
  %331 = vmatpush1.msra.mxu0 0.0
  %332 = vmatprep.subr.mxu0 0.0
  %333 = vmatpush1.msra.mxu0 0.0
  %334 = vmatprep.subr.mxu0 0.0
  %335 = vmatpush1.msra.mxu0 0.0
  %336 = vmatprep.subr.mxu0 0.0
  %337 = vmatpush1.msra.mxu0 0.0
  %338 = vmatprep.subr.mxu0 0.0
  %339 = vmatpush1.msra.mxu0 0.0
  %340 = vmatprep.subr.mxu0 0.0
  %341 = vmatpush1.msra.mxu0 0.0
  %342 = vmatprep.subr.mxu0 0.0
  %343 = vmatpush1.msra.mxu0 0.0
  %344 = vmatprep.subr.mxu0 0.0
  %345 = vmatpush1.msra.mxu0 0.0
  %346 = vmatprep.subr.mxu0 0.0
  %347 = vmatpush1.msra.mxu0 0.0
  %348 = vmatprep.subr.mxu0 0.0
  %349 = vmatpush1.msra.mxu0 0.0
  %350 = vmatprep.subr.mxu0 0.0
  %351 = vmatpush1.msra.mxu0 0.0
  %352 = vmatprep.subr.mxu0 0.0
  %353 = vmatpush1.msra.mxu0 0.0
  %354 = vmatprep.subr.mxu0 0.0
  %355 = vmatpush1.msra.mxu0 %v129
  %356 = vmatprep.subr.mxu0 0.0
  %357 = vmatpush1.msra.mxu0 %v128
  %358 = vmatprep.subr.mxu0 0.0
  %359 = vmatpush1.msra.mxu0 %v127
  %360 = vmatprep.subr.mxu0 0.0
  %361 = vmatpush1.msra.mxu0 %v126
  %362 = vmatprep.subr.mxu0 0.0
  %363 = vmatpush2.msra.mxu0 0.0
  %364 = vmatprep.subr.mxu0 0.0
  %365 = vmatpush2.msra.mxu0 0.0
  %366 = vmatprep.subr.mxu0 0.0
  %367 = vmatpush2.msra.mxu0 0.0
  %368 = vmatprep.subr.mxu0 0.0
  %369 = vmatpush2.msra.mxu0 0.0
  %370 = vmatprep.subr.mxu0 0.0
  %371 = vmatpush2.msra.mxu0 0.0
  %372 = vmatprep.subr.mxu0 0.0
  %373 = vmatpush2.msra.mxu0 0.0
  %374 = vmatprep.subr.mxu0 0.0
  %375 = vmatpush2.msra.mxu0 0.0
  %376 = vmatprep.subr.mxu0 0.0
  %377 = vmatpush2.msra.mxu0 0.0
  %378 = vmatprep.subr.mxu0 0.0
  %379 = vmatpush2.msra.mxu0 0.0
  %380 = vmatprep.subr.mxu0 0.0
  %381 = vmatpush2.msra.mxu0 0.0
  %382 = vmatprep.subr.mxu0 0.0
  %383 = vmatpush2.msra.mxu0 0.0
  %384 = vmatprep.subr.mxu0 0.0
  %385 = vmatpush2.msra.mxu0 0.0
  %386 = vmatprep.subr.mxu0 0.0
  %387 = vmatpush2.msra.mxu0 0.0
  %388 = vmatprep.subr.mxu0 0.0
  %389 = vmatpush2.msra.mxu0 0.0
  %390 = vmatprep.subr.mxu0 0.0
  %391 = vmatpush2.msra.mxu0 0.0
  %392 = vmatprep.subr.mxu0 0.0
  %393 = vmatpush2.msra.mxu0 0.0
  %394 = vmatprep.mubr.f32.mxu0 0.0
  %395 = vmatmul.mubr.f32.gmra.mxu0 %v139
  %v396 = vpop.f32.mrf.mxu0
  %v397 = vadd.f32 %v135, %v396
  %v398 = vpop.f32.mrf.mxu0
  %399 = vmatprep.mubr.f32.mxu0 0.0
  %400 = vmatmul.mubr.f32.gmra.mxu0 %v142
  %v401 = vpop.f32.mrf.mxu0
  %v402 = vadd.f32 %v135, %v401
  %v403 = vpop.f32.mrf.mxu0
  %404 = vmatprep.mubr.f32.mxu0 0.0
  %405 = vmatmul.mubr.f32.gmra.mxu0 %v145
  %v406 = vpop.f32.mrf.mxu0
  %v407 = vadd.f32 %v135, %v406
  %v408 = vpop.f32.mrf.mxu0
  %409 = vmatprep.mubr.f32.mxu0 0.0
  %410 = vmatmul.mubr.f32.gmra.mxu0 %v148
  %v411 = vpop.f32.mrf.mxu0
  %v412 = vadd.f32 %v135, %v411
  %v413 = vpop.f32.mrf.mxu0
  %414 = vmatprep.mubr.f32.mxu0 0.0
  %415 = vmatmul.mubr.f32.gmra.mxu0 %v151
  %v416 = vpop.f32.mrf.mxu0
  %v417 = vadd.f32 %v135, %v416
  %v418 = vpop.f32.mrf.mxu0
  %419 = vmatprep.mubr.f32.mxu0 0.0
  %420 = vmatmul.mubr.f32.gmra.mxu0 %v154
  %v421 = vpop.f32.mrf.mxu0
  %v422 = vadd.f32 %v135, %v421
  %v423 = vpop.f32.mrf.mxu0
  %424 = vmatprep.mubr.f32.mxu0 0.0
  %425 = vmatmul.mubr.f32.gmra.mxu0 %v157
  %v426 = vpop.f32.mrf.mxu0
  %v427 = vadd.f32 %v135, %v426
  %v428 = vpop.f32.mrf.mxu0
  %429 = vmatprep.mubr.f32.mxu0 0.0
  %430 = vmatmul.mubr.f32.gmra.mxu0 %v160
  %v431 = vpop.f32.mrf.mxu0
  %v432 = vadd.f32 %v135, %v431
  %v433 = vpop.f32.mrf.mxu0
  %434 = vmatprep.mubr.f32.mxu0 0.0
  %435 = vmatmul.mubr.f32.gmra.mxu0 %v163
  %v436 = vpop.f32.mrf.mxu0
  %v437 = vadd.f32 %v135, %v436
  %v438 = vpop.f32.mrf.mxu0
  %439 = vmatprep.mubr.f32.mxu0 0.0
  %440 = vmatmul.mubr.f32.gmra.mxu0 %v166
  %v441 = vpop.f32.mrf.mxu0
  %v442 = vadd.f32 %v135, %v441
  %v443 = vpop.f32.mrf.mxu0
  %444 = vmatprep.mubr.f32.mxu0 0.0
  %445 = vmatmul.mubr.f32.gmra.mxu0 %v169
  %v446 = vpop.f32.mrf.mxu0
  %v447 = vadd.f32 %v135, %v446
  %v448 = vpop.f32.mrf.mxu0
  %449 = vmatprep.mubr.f32.mxu0 0.0
  %450 = vmatmul.mubr.f32.gmra.mxu0 %v172
  %v451 = vpop.f32.mrf.mxu0
  %v452 = vadd.f32 %v135, %v451
  %v453 = vpop.f32.mrf.mxu0
  %454 = vmatprep.mubr.f32.mxu0 0.0
  %455 = vmatmul.mubr.f32.gmra.mxu0 %v175
  %v456 = vpop.f32.mrf.mxu0
  %v457 = vadd.f32 %v135, %v456
  %v458 = vpop.f32.mrf.mxu0
  %459 = vmatprep.mubr.f32.mxu0 0.0
  %460 = vmatmul.mubr.f32.gmra.mxu0 %v178
  %v461 = vpop.f32.mrf.mxu0
  %v462 = vadd.f32 %v135, %v461
  %v463 = vpop.f32.mrf.mxu0
  %464 = vmatprep.mubr.f32.mxu0 0.0
  %465 = vmatmul.mubr.f32.gmra.mxu0 %v181
  %v466 = vpop.f32.mrf.mxu0
  %v467 = vadd.f32 %v135, %v466
  %v468 = vpop.f32.mrf.mxu0
  %469 = vmatprep.mubr.f32.mxu0 0.0
  %470 = vmatmul.mubr.f32.gmra.mxu0 %v184
  %v471 = vpop.f32.mrf.mxu0
  %v472 = vadd.f32 %v135, %v471
  %v473 = vpop.f32.mrf.mxu0
  %474 = vmatprep.mubr.f32.mxu0 0.0
  %475 = vmatmul.mubr.f32.gmra.mxu0 %v187
  %v476 = vpop.f32.mrf.mxu0
  %v477 = vadd.f32 %v135, %v476
  %v478 = vpop.f32.mrf.mxu0
  %479 = vmatprep.mubr.f32.mxu0 0.0
  %480 = vmatmul.mubr.f32.gmra.mxu0 %v190
  %v481 = vpop.f32.mrf.mxu0
  %v482 = vadd.f32 %v135, %v481
  %v483 = vpop.f32.mrf.mxu0
  %484 = vmatprep.mubr.f32.mxu0 0.0
  %485 = vmatmul.mubr.f32.gmra.mxu0 %v193
  %v486 = vpop.f32.mrf.mxu0
  %v487 = vadd.f32 %v135, %v486
  %v488 = vpop.f32.mrf.mxu0
  %489 = vmatprep.mubr.f32.mxu0 0.0
  %490 = vmatmul.mubr.f32.gmra.mxu0 %v196
  %v491 = vpop.f32.mrf.mxu0
  %v492 = vadd.f32 %v135, %v491
  %v493 = vpop.f32.mrf.mxu0
  %494 = vmatprep.mubr.f32.mxu0 0.0
  %495 = vmatmul.mubr.f32.gmra.mxu0 %v199
  %v496 = vpop.f32.mrf.mxu0
  %v497 = vadd.f32 %v135, %v496
  %v498 = vpop.f32.mrf.mxu0
  %499 = vmatprep.mubr.f32.mxu0 0.0
  %500 = vmatmul.mubr.f32.gmra.mxu0 %v202
  %v501 = vpop.f32.mrf.mxu0
  %v502 = vadd.f32 %v135, %v501
  %v503 = vpop.f32.mrf.mxu0
  %504 = vmatprep.mubr.f32.mxu0 0.0
  %505 = vmatmul.mubr.f32.gmra.mxu0 %v205
  %v506 = vpop.f32.mrf.mxu0
  %v507 = vadd.f32 %v135, %v506
  %v508 = vpop.f32.mrf.mxu0
  %509 = vmatprep.mubr.f32.mxu0 0.0
  %510 = vmatmul.mubr.f32.gmra.mxu0 %v208
  %v511 = vpop.f32.mrf.mxu0
  %v512 = vadd.f32 %v135, %v511
  %v513 = vpop.f32.mrf.mxu0
  %514 = vmatprep.mubr.f32.mxu0 0.0
  %515 = vmatmul.mubr.f32.gmra.mxu0 %v211
  %v516 = vpop.f32.mrf.mxu0
  %v517 = vadd.f32 %v135, %v516
  %v518 = vpop.f32.mrf.mxu0
  %519 = vmatprep.mubr.f32.mxu0 0.0
  %520 = vmatmul.mubr.f32.gmra.mxu0 %v214
  %v521 = vpop.f32.mrf.mxu0
  %v522 = vadd.f32 %v135, %v521
  %v523 = vpop.f32.mrf.mxu0
  %524 = vmatprep.mubr.f32.mxu0 0.0
  %525 = vmatmul.mubr.f32.gmra.mxu0 %v217
  %v526 = vpop.f32.mrf.mxu0
  %v527 = vadd.f32 %v135, %v526
  %v528 = vpop.f32.mrf.mxu0
  %529 = vmatprep.mubr.f32.mxu0 0.0
  %530 = vmatmul.mubr.f32.gmra.mxu0 %v220
  %v531 = vpop.f32.mrf.mxu0
  %v532 = vadd.f32 %v135, %v531
  %v533 = vpop.f32.mrf.mxu0
  %534 = vmatprep.mubr.f32.mxu0 0.0
  %535 = vmatmul.mubr.f32.gmra.mxu0 %v223
  %v536 = vpop.f32.mrf.mxu0
  %v537 = vadd.f32 %v135, %v536
  %v538 = vpop.f32.mrf.mxu0
  %539 = vmatprep.mubr.f32.mxu0 0.0
  %540 = vmatmul.mubr.f32.gmra.mxu0 %v226
  %v541 = vpop.f32.mrf.mxu0
  %v542 = vadd.f32 %v135, %v541
  %v543 = vpop.f32.mrf.mxu0
  %544 = vmatprep.mubr.f32.mxu0 0.0
  %545 = vmatmul.mubr.f32.gmra.mxu0 %v229
  %v546 = vpop.f32.mrf.mxu0
  %v547 = vadd.f32 %v135, %v546
  %v548 = vpop.f32.mrf.mxu0
  %549 = vmatprep.mubr.f32.mxu0 0.0
  %550 = vmatmul.mubr.f32.gmra.mxu0 %v232
  %v551 = vpop.f32.mrf.mxu0
  %v552 = vadd.f32 %v135, %v551
  %v553 = vpop.f32.mrf.mxu0
  %554 = vmatprep.mubr.f32.mxu0 0.0
  %555 = vmatmul.mubr.f32.gmra.mxu0 %v235
  %v556 = vpop.f32.mrf.mxu0
  %v557 = vadd.f32 %v135, %v556
  %v558 = vpop.f32.mrf.mxu0
  %559 = vmatprep.mubr.f32.mxu0 0.0
  %560 = vmatmul.mubr.f32.gmra.mxu0 %v238
  %v561 = vpop.f32.mrf.mxu0
  %v562 = vadd.f32 %v135, %v561
  %v563 = vpop.f32.mrf.mxu0
  %564 = vmatprep.mubr.f32.mxu0 0.0
  %565 = vmatmul.mubr.f32.gmra.mxu0 %v241
  %v566 = vpop.f32.mrf.mxu0
  %v567 = vadd.f32 %v135, %v566
  %v568 = vpop.f32.mrf.mxu0
  %569 = vmatprep.mubr.f32.mxu0 0.0
  %570 = vmatmul.mubr.f32.gmra.mxu0 %v244
  %v571 = vpop.f32.mrf.mxu0
  %v572 = vadd.f32 %v135, %v571
  %v573 = vpop.f32.mrf.mxu0
  %574 = vmatprep.mubr.f32.mxu0 0.0
  %575 = vmatmul.mubr.f32.gmra.mxu0 %v247
  %v576 = vpop.f32.mrf.mxu0
  %v577 = vadd.f32 %v135, %v576
  %v578 = vpop.f32.mrf.mxu0
  %579 = vmatprep.mubr.f32.mxu0 0.0
  %580 = vmatmul.mubr.f32.gmra.mxu0 %v250
  %v581 = vpop.f32.mrf.mxu0
  %v582 = vadd.f32 %v135, %v581
  %v583 = vpop.f32.mrf.mxu0
  %584 = vmatprep.mubr.f32.mxu0 0.0
  %585 = vmatmul.mubr.f32.gmra.mxu0 %v253
  %v586 = vpop.f32.mrf.mxu0
  %v587 = vadd.f32 %v135, %v586
  %v588 = vpop.f32.mrf.mxu0
  %589 = vmatprep.mubr.f32.mxu0 0.0
  %590 = vmatmul.mubr.f32.gmra.mxu0 %v256
  %v591 = vpop.f32.mrf.mxu0
  %v592 = vadd.f32 %v135, %v591
  %v593 = vpop.f32.mrf.mxu0
  %594 = vmatprep.mubr.f32.mxu0 0.0
  %595 = vmatmul.mubr.f32.gmra.mxu0 %v259
  %v596 = vpop.f32.mrf.mxu0
  %v597 = vadd.f32 %v135, %v596
  %v598 = vpop.f32.mrf.mxu0
  %599 = vmatprep.mubr.f32.mxu0 0.0
  %600 = vmatmul.mubr.f32.gmra.mxu0 %v262
  %v601 = vpop.f32.mrf.mxu0
  %v602 = vadd.f32 %v135, %v601
  %v603 = vpop.f32.mrf.mxu0
  %604 = vmatprep.mubr.f32.mxu0 0.0
  %605 = vmatmul.mubr.f32.gmra.mxu0 %v265
  %v606 = vpop.f32.mrf.mxu0
  %v607 = vadd.f32 %v135, %v606
  %v608 = vpop.f32.mrf.mxu0
  %609 = vmatprep.mubr.f32.mxu0 0.0
  %610 = vmatmul.mubr.f32.gmra.mxu0 %v268
  %v611 = vpop.f32.mrf.mxu0
  %v612 = vadd.f32 %v135, %v611
  %v613 = vpop.f32.mrf.mxu0
  %614 = vmatprep.mubr.f32.mxu0 0.0
  %615 = vmatmul.mubr.f32.gmra.mxu0 %v271
  %v616 = vpop.f32.mrf.mxu0
  %v617 = vadd.f32 %v135, %v616
  %v618 = vpop.f32.mrf.mxu0
  %619 = vmatprep.mubr.f32.mxu0 0.0
  %620 = vmatmul.mubr.f32.gmra.mxu0 %v274
  %v621 = vpop.f32.mrf.mxu0
  %v622 = vadd.f32 %v135, %v621
  %v623 = vpop.f32.mrf.mxu0
  %624 = vmatprep.mubr.f32.mxu0 0.0
  %625 = vmatmul.mubr.f32.gmra.mxu0 %v277
  %v626 = vpop.f32.mrf.mxu0
  %v627 = vadd.f32 %v135, %v626
  %v628 = vpop.f32.mrf.mxu0
  %629 = vmatprep.mubr.f32.mxu0 0.0
  %630 = vmatmul.mubr.f32.gmra.mxu0 %v280
  %v631 = vpop.f32.mrf.mxu0
  %v632 = vadd.f32 %v135, %v631
  %v633 = vpop.f32.mrf.mxu0
  %634 = vmatprep.mubr.f32.mxu0 0.0
  %635 = vmatmul.mubr.f32.gmra.mxu0 %v283
  %v636 = vpop.f32.mrf.mxu0
  %v637 = vadd.f32 %v135, %v636
  %v638 = vpop.f32.mrf.mxu0
  %639 = vmatprep.mubr.f32.mxu0 0.0
  %640 = vmatmul.mubr.f32.gmra.mxu0 %v286
  %v641 = vpop.f32.mrf.mxu0
  %v642 = vadd.f32 %v135, %v641
  %v643 = vpop.f32.mrf.mxu0
  %644 = vmatprep.mubr.f32.mxu0 0.0
  %645 = vmatmul.mubr.f32.gmra.mxu0 %v289
  %v646 = vpop.f32.mrf.mxu0
  %v647 = vadd.f32 %v135, %v646
  %v648 = vpop.f32.mrf.mxu0
  %649 = vmatprep.mubr.f32.mxu0 0.0
  %650 = vmatmul.mubr.f32.gmra.mxu0 %v292
  %v651 = vpop.f32.mrf.mxu0
  %v652 = vadd.f32 %v135, %v651
  %v653 = vpop.f32.mrf.mxu0
  %654 = vmatprep.mubr.f32.mxu0 0.0
  %655 = vmatmul.mubr.f32.gmra.mxu0 %v295
  %v656 = vpop.f32.mrf.mxu0
  %v657 = vadd.f32 %v135, %v656
  %v658 = vpop.f32.mrf.mxu0
  %659 = vmatprep.mubr.f32.mxu0 0.0
  %660 = vmatmul.mubr.f32.gmra.mxu0 %v298
  %v661 = vpop.f32.mrf.mxu0
  %v662 = vadd.f32 %v135, %v661
  %v663 = vpop.f32.mrf.mxu0
  %664 = vmatprep.mubr.f32.mxu0 0.0
  %665 = vmatmul.mubr.f32.gmra.mxu0 %v301
  %v666 = vpop.f32.mrf.mxu0
  %v667 = vadd.f32 %v135, %v666
  %v668 = vpop.f32.mrf.mxu0
  %669 = vmatprep.mubr.f32.mxu0 0.0
  %670 = vmatmul.mubr.f32.gmra.mxu0 %v304
  %v671 = vpop.f32.mrf.mxu0
  %v672 = vadd.f32 %v135, %v671
  %v673 = vpop.f32.mrf.mxu0
  %674 = vmatprep.mubr.f32.mxu0 0.0
  %675 = vmatmul.mubr.f32.gmra.mxu0 %v307
  %v676 = vpop.f32.mrf.mxu0
  %v677 = vadd.f32 %v135, %v676
  %v678 = vpop.f32.mrf.mxu0
  %679 = vmatprep.mubr.f32.mxu0 0.0
  %680 = vmatmul.mubr.f32.gmra.mxu0 %v310
  %v681 = vpop.f32.mrf.mxu0
  %v682 = vadd.f32 %v135, %v681
  %v683 = vpop.f32.mrf.mxu0
  %684 = vmatprep.mubr.f32.mxu0 0.0
  %685 = vmatmul.mubr.f32.gmra.mxu0 %v313
  %v686 = vpop.f32.mrf.mxu0
  %v687 = vadd.f32 %v135, %v686
  %v688 = vpop.f32.mrf.mxu0
  %689 = vmatprep.mubr.f32.mxu0 0.0
  %690 = vmatmul.mubr.f32.gmra.mxu0 %v316
  %v691 = vpop.f32.mrf.mxu0
  %v692 = vadd.f32 %v135, %v691
  %v693 = vpop.f32.mrf.mxu0
  %694 = vmatprep.mubr.f32.mxu0 0.0
  %695 = vmatmul.mubr.f32.gmra.mxu0 %v319
  %v696 = vpop.f32.mrf.mxu0
  %v697 = vadd.f32 %v135, %v696
  %v698 = vpop.f32.mrf.mxu0
  %699 = vmatprep.mubr.f32.mxu0 0.0
  %700 = vmatmul.mubr.f32.gmra.mxu0 %v322
  %v701 = vpop.f32.mrf.mxu0
  %v702 = vadd.f32 %v135, %v701
  %v703 = vpop.f32.mrf.mxu0
  %704 = vmatprep.mubr.f32.mxu0 0.0
  %705 = vmatmul.mubr.f32.gmra.mxu0 %v325
  %v706 = vpop.f32.mrf.mxu0
  %v707 = vadd.f32 %v135, %v706
  %v708 = vpop.f32.mrf.mxu0
  %709 = vmatprep.mubr.f32.mxu0 0.0
  %710 = vmatmul.mubr.f32.gmra.mxu0 %v328
  %v711 = vpop.f32.mrf.mxu0
  %v712 = vadd.f32 %v135, %v711
  %v713 = vpop.f32.mrf.mxu0
  %714 = vdwg.mxu0
  %v715 = vmax.f32 %v397, 0.0
  %v716 = vmax.f32 %v402, 0.0
  %v717 = vmax.f32 %v407, 0.0
  %v718 = vmax.f32 %v412, 0.0
  %v719 = vmax.f32 %v417, 0.0
  %v720 = vmax.f32 %v422, 0.0
  %v721 = vmax.f32 %v427, 0.0
  %v722 = vmax.f32 %v432, 0.0
  %v723 = vmax.f32 %v437, 0.0
  %v724 = vmax.f32 %v442, 0.0
  %v725 = vmax.f32 %v447, 0.0
  %v726 = vmax.f32 %v452, 0.0
  %v727 = vmax.f32 %v457, 0.0
  %v728 = vmax.f32 %v462, 0.0
  %v729 = vmax.f32 %v467, 0.0
  %v730 = vmax.f32 %v472, 0.0
  %v731 = vmax.f32 %v477, 0.0
  %v732 = vmax.f32 %v482, 0.0
  %v733 = vmax.f32 %v487, 0.0
  %v734 = vmax.f32 %v492, 0.0
  %v735 = vmax.f32 %v497, 0.0
  %v736 = vmax.f32 %v502, 0.0
  %v737 = vmax.f32 %v507, 0.0
  %v738 = vmax.f32 %v512, 0.0
  %v739 = vmax.f32 %v517, 0.0
  %v740 = vmax.f32 %v522, 0.0
  %v741 = vmax.f32 %v527, 0.0
  %v742 = vmax.f32 %v532, 0.0
  %v743 = vmax.f32 %v537, 0.0
  %v744 = vmax.f32 %v542, 0.0
  %v745 = vmax.f32 %v547, 0.0
  %v746 = vmax.f32 %v552, 0.0
  %v747 = vmax.f32 %v557, 0.0
  %v748 = vmax.f32 %v562, 0.0
  %v749 = vmax.f32 %v567, 0.0
  %v750 = vmax.f32 %v572, 0.0
  %v751 = vmax.f32 %v577, 0.0
  %v752 = vmax.f32 %v582, 0.0
  %v753 = vmax.f32 %v587, 0.0
  %v754 = vmax.f32 %v592, 0.0
  %v755 = vmax.f32 %v597, 0.0
  %v756 = vmax.f32 %v602, 0.0
  %v757 = vmax.f32 %v607, 0.0
  %v758 = vmax.f32 %v612, 0.0
  %v759 = vmax.f32 %v617, 0.0
  %v760 = vmax.f32 %v622, 0.0
  %v761 = vmax.f32 %v627, 0.0
  %v762 = vmax.f32 %v632, 0.0
  %v763 = vmax.f32 %v637, 0.0
  %v764 = vmax.f32 %v642, 0.0
  %v765 = vmax.f32 %v647, 0.0
  %v766 = vmax.f32 %v652, 0.0
  %v767 = vmax.f32 %v657, 0.0
  %v768 = vmax.f32 %v662, 0.0
  %v769 = vmax.f32 %v667, 0.0
  %v770 = vmax.f32 %v672, 0.0
  %v771 = vmax.f32 %v677, 0.0
  %v772 = vmax.f32 %v682, 0.0
  %v773 = vmax.f32 %v687, 0.0
  %v774 = vmax.f32 %v692, 0.0
  %v775 = vmax.f32 %v697, 0.0
  %v776 = vmax.f32 %v702, 0.0
  %v777 = vmax.f32 %v707, 0.0
  %v778 = vmax.f32 %v712, 0.0
  %v779 = vld [vmem:[%s6] sm:$0xff]
  %v780 = vld [vmem:[%s6 + $0x8] sm:$0xff]
  %v781 = vld [vmem:[%s6 + $0x10] sm:$0xff]
  %v782 = vld [vmem:[%s6 + $0x18] sm:$0xff]
  %v784 = vsel %vm137, %v46, 0
  %v787 = vsel %vm137, %v47, 0
  %v790 = vsel %vm137, %v48, 0
  %v793 = vsel %vm137, %v49, 0
  %v796 = vsel %vm137, %v50, 0
  %v799 = vsel %vm137, %v51, 0
  %v802 = vsel %vm137, %v52, 0
  %v805 = vsel %vm137, %v53, 0
  %807 = vmatprep.subr.mxu0 0.0
  %808 = vmatpush1.msra.mxu0 0.0
  %809 = vmatprep.subr.mxu0 0.0
  %810 = vmatpush1.msra.mxu0 0.0
  %811 = vmatprep.subr.mxu0 0.0
  %812 = vmatpush1.msra.mxu0 0.0
  %813 = vmatprep.subr.mxu0 0.0
  %814 = vmatpush1.msra.mxu0 0.0
  %815 = vmatprep.subr.mxu0 0.0
  %816 = vmatpush1.msra.mxu0 0.0
  %817 = vmatprep.subr.mxu0 0.0
  %818 = vmatpush1.msra.mxu0 0.0
  %819 = vmatprep.subr.mxu0 0.0
  %820 = vmatpush1.msra.mxu0 0.0
  %821 = vmatprep.subr.mxu0 0.0
  %822 = vmatpush1.msra.mxu0 0.0
  %823 = vmatprep.subr.mxu0 0.0
  %824 = vmatpush1.msra.mxu0 0.0
  %825 = vmatprep.subr.mxu0 0.0
  %826 = vmatpush1.msra.mxu0 0.0
  %827 = vmatprep.subr.mxu0 0.0
  %828 = vmatpush1.msra.mxu0 0.0
  %829 = vmatprep.subr.mxu0 0.0
  %830 = vmatpush1.msra.mxu0 0.0
  %831 = vmatprep.subr.mxu0 0.0
  %832 = vmatpush1.msra.mxu0 %v782
  %833 = vmatprep.subr.mxu0 0.0
  %834 = vmatpush1.msra.mxu0 %v781
  %835 = vmatprep.subr.mxu0 0.0
  %836 = vmatpush1.msra.mxu0 %v780
  %837 = vmatprep.subr.mxu0 0.0
  %838 = vmatpush1.msra.mxu0 %v779
  %839 = vmatprep.subr.mxu0 0.0
  %840 = vmatpush2.msra.mxu0 0.0
  %841 = vmatprep.subr.mxu0 0.0
  %842 = vmatpush2.msra.mxu0 0.0
  %843 = vmatprep.subr.mxu0 0.0
  %844 = vmatpush2.msra.mxu0 0.0
  %845 = vmatprep.subr.mxu0 0.0
  %846 = vmatpush2.msra.mxu0 0.0
  %847 = vmatprep.subr.mxu0 0.0
  %848 = vmatpush2.msra.mxu0 0.0
  %849 = vmatprep.subr.mxu0 0.0
  %850 = vmatpush2.msra.mxu0 0.0
  %851 = vmatprep.subr.mxu0 0.0
  %852 = vmatpush2.msra.mxu0 0.0
  %853 = vmatprep.subr.mxu0 0.0
  %854 = vmatpush2.msra.mxu0 0.0
  %855 = vmatprep.subr.mxu0 0.0
  %856 = vmatpush2.msra.mxu0 0.0
  %857 = vmatprep.subr.mxu0 0.0
  %858 = vmatpush2.msra.mxu0 0.0
  %859 = vmatprep.subr.mxu0 0.0
  %860 = vmatpush2.msra.mxu0 0.0
  %861 = vmatprep.subr.mxu0 0.0
  %862 = vmatpush2.msra.mxu0 0.0
  %863 = vmatprep.subr.mxu0 0.0
  %864 = vmatpush2.msra.mxu0 0.0
  %865 = vmatprep.subr.mxu0 0.0
  %866 = vmatpush2.msra.mxu0 0.0
  %867 = vmatprep.subr.mxu0 0.0
  %868 = vmatpush2.msra.mxu0 0.0
  %869 = vmatprep.subr.mxu0 0.0
  %870 = vmatpush2.msra.mxu0 0.0
  %871 = vmatprep.mubr.f32.mxu0 0.0
  %872 = vmatmul.mubr.f32.gmra.mxu0 %v784
  %v873 = vpop.f32.mrf.mxu0
  %v874 = vadd.f32 0.0, %v873
  %v875 = vpop.f32.mrf.mxu0
  %876 = vmatprep.mubr.f32.mxu0 0.0
  %877 = vmatmul.mubr.f32.gmra.mxu0 %v787
  %v878 = vpop.f32.mrf.mxu0
  %v879 = vadd.f32 0.0, %v878
  %v880 = vpop.f32.mrf.mxu0
  %881 = vmatprep.mubr.f32.mxu0 0.0
  %882 = vmatmul.mubr.f32.gmra.mxu0 %v790
  %v883 = vpop.f32.mrf.mxu0
  %v884 = vadd.f32 0.0, %v883
  %v885 = vpop.f32.mrf.mxu0
  %886 = vmatprep.mubr.f32.mxu0 0.0
  %887 = vmatmul.mubr.f32.gmra.mxu0 %v793
  %v888 = vpop.f32.mrf.mxu0
  %v889 = vadd.f32 0.0, %v888
  %v890 = vpop.f32.mrf.mxu0
  %891 = vmatprep.mubr.f32.mxu0 0.0
  %892 = vmatmul.mubr.f32.gmra.mxu0 %v796
  %v893 = vpop.f32.mrf.mxu0
  %v894 = vadd.f32 0.0, %v893
  %v895 = vpop.f32.mrf.mxu0
  %896 = vmatprep.mubr.f32.mxu0 0.0
  %897 = vmatmul.mubr.f32.gmra.mxu0 %v799
  %v898 = vpop.f32.mrf.mxu0
  %v899 = vadd.f32 0.0, %v898
  %v900 = vpop.f32.mrf.mxu0
  %901 = vmatprep.mubr.f32.mxu0 0.0
  %902 = vmatmul.mubr.f32.gmra.mxu0 %v802
  %v903 = vpop.f32.mrf.mxu0
  %v904 = vadd.f32 0.0, %v903
  %v905 = vpop.f32.mrf.mxu0
  %906 = vmatprep.mubr.f32.mxu0 0.0
  %907 = vmatmul.mubr.f32.gmra.mxu0 %v805
  %v908 = vpop.f32.mrf.mxu0
  %v909 = vadd.f32 0.0, %v908
  %v910 = vpop.f32.mrf.mxu0
  %911 = vdwg.mxu0
  %v912 = vld [vmem:[%s11] sm:$0xff]
  %v913 = vld [vmem:[%s11 + $0x8] sm:$0xff]
  %v914 = vld [vmem:[%s11 + $0x10] sm:$0xff]
  %v915 = vld [vmem:[%s11 + $0x18] sm:$0xff]
  %v916 = vld [vmem:[%s11 + $0x20] sm:$0xff]
  %v917 = vld [vmem:[%s11 + $0x28] sm:$0xff]
  %v918 = vld [vmem:[%s11 + $0x30] sm:$0xff]
  %v919 = vld [vmem:[%s11 + $0x38] sm:$0xff]
  %v920 = vld [vmem:[%s11 + $0x40] sm:$0xff]
  %v921 = vld [vmem:[%s11 + $0x48] sm:$0xff]
  %v922 = vld [vmem:[%s11 + $0x50] sm:$0xff]
  %v923 = vld [vmem:[%s11 + $0x58] sm:$0xff]
  %v924 = vld [vmem:[%s11 + $0x60] sm:$0xff]
  %v925 = vld [vmem:[%s11 + $0x68] sm:$0xff]
  %v926 = vld [vmem:[%s11 + $0x70] sm:$0xff]
  %v927 = vld [vmem:[%s11 + $0x78] sm:$0xff]
  %v928 = vld [vmem:[%s11 + $0x80] sm:$0xff]
  %v929 = vld [vmem:[%s11 + $0x88] sm:$0xff]
  %v930 = vld [vmem:[%s11 + $0x90] sm:$0xff]
  %v931 = vld [vmem:[%s11 + $0x98] sm:$0xff]
  %v932 = vld [vmem:[%s11 + $0xa0] sm:$0xff]
  %v933 = vld [vmem:[%s11 + $0xa8] sm:$0xff]
  %v934 = vld [vmem:[%s11 + $0xb0] sm:$0xff]
  %v935 = vld [vmem:[%s11 + $0xb8] sm:$0xff]
  %v936 = vld [vmem:[%s11 + $0xc0] sm:$0xff]
  %v937 = vld [vmem:[%s11 + $0xc8] sm:$0xff]
  %v938 = vld [vmem:[%s11 + $0xd0] sm:$0xff]
  %v939 = vld [vmem:[%s11 + $0xd8] sm:$0xff]
  %v940 = vld [vmem:[%s11 + $0xe0] sm:$0xff]
  %v941 = vld [vmem:[%s11 + $0xe8] sm:$0xff]
  %v942 = vld [vmem:[%s11 + $0xf0] sm:$0xff]
  %v943 = vld [vmem:[%s11 + $0xf8] sm:$0xff]
  %v944 = vld [vmem:[%s11 + $0x100] sm:$0xff]
  %v945 = vld [vmem:[%s11 + $0x108] sm:$0xff]
  %v946 = vld [vmem:[%s11 + $0x110] sm:$0xff]
  %v947 = vld [vmem:[%s11 + $0x118] sm:$0xff]
  %v948 = vld [vmem:[%s11 + $0x120] sm:$0xff]
  %v949 = vld [vmem:[%s11 + $0x128] sm:$0xff]
  %v950 = vld [vmem:[%s11 + $0x130] sm:$0xff]
  %v951 = vld [vmem:[%s11 + $0x138] sm:$0xff]
  %v952 = vld [vmem:[%s11 + $0x140] sm:$0xff]
  %v953 = vld [vmem:[%s11 + $0x148] sm:$0xff]
  %v954 = vld [vmem:[%s11 + $0x150] sm:$0xff]
  %v955 = vld [vmem:[%s11 + $0x158] sm:$0xff]
  %v956 = vld [vmem:[%s11 + $0x160] sm:$0xff]
  %v957 = vld [vmem:[%s11 + $0x168] sm:$0xff]
  %v958 = vld [vmem:[%s11 + $0x170] sm:$0xff]
  %v959 = vld [vmem:[%s11 + $0x178] sm:$0xff]
  %v960 = vld [vmem:[%s11 + $0x180] sm:$0xff]
  %v961 = vld [vmem:[%s11 + $0x188] sm:$0xff]
  %v962 = vld [vmem:[%s11 + $0x190] sm:$0xff]
  %v963 = vld [vmem:[%s11 + $0x198] sm:$0xff]
  %v964 = vld [vmem:[%s11 + $0x1a0] sm:$0xff]
  %v965 = vld [vmem:[%s11 + $0x1a8] sm:$0xff]
  %v966 = vld [vmem:[%s11 + $0x1b0] sm:$0xff]
  %v967 = vld [vmem:[%s11 + $0x1b8] sm:$0xff]
  %v968 = vld [vmem:[%s11 + $0x1c0] sm:$0xff]
  %v969 = vld [vmem:[%s11 + $0x1c8] sm:$0xff]
  %v970 = vld [vmem:[%s11 + $0x1d0] sm:$0xff]
  %v971 = vld [vmem:[%s11 + $0x1d8] sm:$0xff]
  %v972 = vld [vmem:[%s11 + $0x1e0] sm:$0xff]
  %v973 = vld [vmem:[%s11 + $0x1e8] sm:$0xff]
  %v974 = vld [vmem:[%s11 + $0x1f0] sm:$0xff]
  %v975 = vld [vmem:[%s11 + $0x1f8] sm:$0xff]
  %vm976 = vcmask 523264
  %v978 = vsel %vm976, %v912, 0
  %v981 = vsel %vm976, %v913, 0
  %v984 = vsel %vm976, %v914, 0
  %v987 = vsel %vm976, %v915, 0
  %v990 = vsel %vm976, %v916, 0
  %v993 = vsel %vm976, %v917, 0
  %v996 = vsel %vm976, %v918, 0
  %v999 = vsel %vm976, %v919, 0
  %v1002 = vsel %vm976, %v920, 0
  %v1005 = vsel %vm976, %v921, 0
  %v1008 = vsel %vm976, %v922, 0
  %v1011 = vsel %vm976, %v923, 0
  %v1014 = vsel %vm976, %v924, 0
  %v1017 = vsel %vm976, %v925, 0
  %v1020 = vsel %vm976, %v926, 0
  %v1023 = vsel %vm976, %v927, 0
  %v1026 = vsel %vm976, %v928, 0
  %v1029 = vsel %vm976, %v929, 0
  %v1032 = vsel %vm976, %v930, 0
  %v1035 = vsel %vm976, %v931, 0
  %v1038 = vsel %vm976, %v932, 0
  %v1041 = vsel %vm976, %v933, 0
  %v1044 = vsel %vm976, %v934, 0
  %v1047 = vsel %vm976, %v935, 0
  %v1050 = vsel %vm976, %v936, 0
  %v1053 = vsel %vm976, %v937, 0
  %v1056 = vsel %vm976, %v938, 0
  %v1059 = vsel %vm976, %v939, 0
  %v1062 = vsel %vm976, %v940, 0
  %v1065 = vsel %vm976, %v941, 0
  %v1068 = vsel %vm976, %v942, 0
  %v1071 = vsel %vm976, %v943, 0
  %v1074 = vsel %vm976, %v944, 0
  %v1077 = vsel %vm976, %v945, 0
  %v1080 = vsel %vm976, %v946, 0
  %v1083 = vsel %vm976, %v947, 0
  %v1086 = vsel %vm976, %v948, 0
  %v1089 = vsel %vm976, %v949, 0
  %v1092 = vsel %vm976, %v950, 0
  %v1095 = vsel %vm976, %v951, 0
  %v1098 = vsel %vm976, %v952, 0
  %v1101 = vsel %vm976, %v953, 0
  %v1104 = vsel %vm976, %v954, 0
  %v1107 = vsel %vm976, %v955, 0
  %v1110 = vsel %vm976, %v956, 0
  %v1113 = vsel %vm976, %v957, 0
  %v1116 = vsel %vm976, %v958, 0
  %v1119 = vsel %vm976, %v959, 0
  %v1122 = vsel %vm976, %v960, 0
  %v1125 = vsel %vm976, %v961, 0
  %v1128 = vsel %vm976, %v962, 0
  %v1131 = vsel %vm976, %v963, 0
  %v1134 = vsel %vm976, %v964, 0
  %v1137 = vsel %vm976, %v965, 0
  %v1140 = vsel %vm976, %v966, 0
  %v1143 = vsel %vm976, %v967, 0
  %v1146 = vsel %vm976, %v968, 0
  %v1149 = vsel %vm976, %v969, 0
  %v1152 = vsel %vm976, %v970, 0
  %v1155 = vsel %vm976, %v971, 0
  %v1158 = vsel %vm976, %v972, 0
  %v1161 = vsel %vm976, %v973, 0
  %v1164 = vsel %vm976, %v974, 0
  %v1167 = vsel %vm976, %v975, 0
  %1169 = vmatprep.subr.mxu0 0.0
  %1170 = vmatpush1.msra.mxu0 0.0
  %1171 = vmatprep.subr.mxu0 0.0
  %1172 = vmatpush1.msra.mxu0 0.0
  %1173 = vmatprep.subr.mxu0 0.0
  %1174 = vmatpush1.msra.mxu0 0.0
  %1175 = vmatprep.subr.mxu0 0.0
  %1176 = vmatpush1.msra.mxu0 0.0
  %1177 = vmatprep.subr.mxu0 0.0
  %1178 = vmatpush1.msra.mxu0 0.0
  %1179 = vmatprep.subr.mxu0 0.0
  %1180 = vmatpush1.msra.mxu0 0.0
  %1181 = vmatprep.subr.mxu0 0.0
  %1182 = vmatpush1.msra.mxu0 0.0
  %1183 = vmatprep.subr.mxu0 0.0
  %1184 = vmatpush1.msra.mxu0 0.0
  %1185 = vmatprep.subr.mxu0 0.0
  %1186 = vmatpush1.msra.mxu0 %v909
  %1187 = vmatprep.subr.mxu0 0.0
  %1188 = vmatpush1.msra.mxu0 %v904
  %1189 = vmatprep.subr.mxu0 0.0
  %1190 = vmatpush1.msra.mxu0 %v899
  %1191 = vmatprep.subr.mxu0 0.0
  %1192 = vmatpush1.msra.mxu0 %v894
  %1193 = vmatprep.subr.mxu0 0.0
  %1194 = vmatpush1.msra.mxu0 %v889
  %1195 = vmatprep.subr.mxu0 0.0
  %1196 = vmatpush1.msra.mxu0 %v884
  %1197 = vmatprep.subr.mxu0 0.0
  %1198 = vmatpush1.msra.mxu0 %v879
  %1199 = vmatprep.subr.mxu0 0.0
  %1200 = vmatpush1.msra.mxu0 %v874
  %1201 = vmatprep.subr.mxu0 0.0
  %1202 = vmatpush2.msra.mxu0 0.0
  %1203 = vmatprep.subr.mxu0 0.0
  %1204 = vmatpush2.msra.mxu0 0.0
  %1205 = vmatprep.subr.mxu0 0.0
  %1206 = vmatpush2.msra.mxu0 0.0
  %1207 = vmatprep.subr.mxu0 0.0
  %1208 = vmatpush2.msra.mxu0 0.0
  %1209 = vmatprep.subr.mxu0 0.0
  %1210 = vmatpush2.msra.mxu0 0.0
  %1211 = vmatprep.subr.mxu0 0.0
  %1212 = vmatpush2.msra.mxu0 0.0
  %1213 = vmatprep.subr.mxu0 0.0
  %1214 = vmatpush2.msra.mxu0 0.0
  %1215 = vmatprep.subr.mxu0 0.0
  %1216 = vmatpush2.msra.mxu0 0.0
  %1217 = vmatprep.subr.mxu0 0.0
  %1218 = vmatpush2.msra.mxu0 0.0
  %1219 = vmatprep.subr.mxu0 0.0
  %1220 = vmatpush2.msra.mxu0 0.0
  %1221 = vmatprep.subr.mxu0 0.0
  %1222 = vmatpush2.msra.mxu0 0.0
  %1223 = vmatprep.subr.mxu0 0.0
  %1224 = vmatpush2.msra.mxu0 0.0
  %1225 = vmatprep.subr.mxu0 0.0
  %1226 = vmatpush2.msra.mxu0 0.0
  %1227 = vmatprep.subr.mxu0 0.0
  %1228 = vmatpush2.msra.mxu0 0.0
  %1229 = vmatprep.subr.mxu0 0.0
  %1230 = vmatpush2.msra.mxu0 0.0
  %1231 = vmatprep.subr.mxu0 0.0
  %1232 = vmatpush2.msra.mxu0 0.0
  %1233 = vmatprep.mubr.f32.mxu0 0.0
  %1234 = vmatmul.mubr.f32.gmra.mxu0 %v978
  %v1235 = vpop.f32.mrf.mxu0
  %v1236 = vadd.f32 0.0, %v1235
  %v1237 = vpop.f32.mrf.mxu0
  %1238 = vmatprep.mubr.f32.mxu0 0.0
  %1239 = vmatmul.mubr.f32.gmra.mxu0 %v981
  %v1240 = vpop.f32.mrf.mxu0
  %v1241 = vadd.f32 0.0, %v1240
  %v1242 = vpop.f32.mrf.mxu0
  %1243 = vmatprep.mubr.f32.mxu0 0.0
  %1244 = vmatmul.mubr.f32.gmra.mxu0 %v984
  %v1245 = vpop.f32.mrf.mxu0
  %v1246 = vadd.f32 0.0, %v1245
  %v1247 = vpop.f32.mrf.mxu0
  %1248 = vmatprep.mubr.f32.mxu0 0.0
  %1249 = vmatmul.mubr.f32.gmra.mxu0 %v987
  %v1250 = vpop.f32.mrf.mxu0
  %v1251 = vadd.f32 0.0, %v1250
  %v1252 = vpop.f32.mrf.mxu0
  %1253 = vmatprep.mubr.f32.mxu0 0.0
  %1254 = vmatmul.mubr.f32.gmra.mxu0 %v990
  %v1255 = vpop.f32.mrf.mxu0
  %v1256 = vadd.f32 0.0, %v1255
  %v1257 = vpop.f32.mrf.mxu0
  %1258 = vmatprep.mubr.f32.mxu0 0.0
  %1259 = vmatmul.mubr.f32.gmra.mxu0 %v993
  %v1260 = vpop.f32.mrf.mxu0
  %v1261 = vadd.f32 0.0, %v1260
  %v1262 = vpop.f32.mrf.mxu0
  %1263 = vmatprep.mubr.f32.mxu0 0.0
  %1264 = vmatmul.mubr.f32.gmra.mxu0 %v996
  %v1265 = vpop.f32.mrf.mxu0
  %v1266 = vadd.f32 0.0, %v1265
  %v1267 = vpop.f32.mrf.mxu0
  %1268 = vmatprep.mubr.f32.mxu0 0.0
  %1269 = vmatmul.mubr.f32.gmra.mxu0 %v999
  %v1270 = vpop.f32.mrf.mxu0
  %v1271 = vadd.f32 0.0, %v1270
  %v1272 = vpop.f32.mrf.mxu0
  %1273 = vmatprep.mubr.f32.mxu0 0.0
  %1274 = vmatmul.mubr.f32.gmra.mxu0 %v1002
  %v1275 = vpop.f32.mrf.mxu0
  %v1276 = vadd.f32 0.0, %v1275
  %v1277 = vpop.f32.mrf.mxu0
  %1278 = vmatprep.mubr.f32.mxu0 0.0
  %1279 = vmatmul.mubr.f32.gmra.mxu0 %v1005
  %v1280 = vpop.f32.mrf.mxu0
  %v1281 = vadd.f32 0.0, %v1280
  %v1282 = vpop.f32.mrf.mxu0
  %1283 = vmatprep.mubr.f32.mxu0 0.0
  %1284 = vmatmul.mubr.f32.gmra.mxu0 %v1008
  %v1285 = vpop.f32.mrf.mxu0
  %v1286 = vadd.f32 0.0, %v1285
  %v1287 = vpop.f32.mrf.mxu0
  %1288 = vmatprep.mubr.f32.mxu0 0.0
  %1289 = vmatmul.mubr.f32.gmra.mxu0 %v1011
  %v1290 = vpop.f32.mrf.mxu0
  %v1291 = vadd.f32 0.0, %v1290
  %v1292 = vpop.f32.mrf.mxu0
  %1293 = vmatprep.mubr.f32.mxu0 0.0
  %1294 = vmatmul.mubr.f32.gmra.mxu0 %v1014
  %v1295 = vpop.f32.mrf.mxu0
  %v1296 = vadd.f32 0.0, %v1295
  %v1297 = vpop.f32.mrf.mxu0
  %1298 = vmatprep.mubr.f32.mxu0 0.0
  %1299 = vmatmul.mubr.f32.gmra.mxu0 %v1017
  %v1300 = vpop.f32.mrf.mxu0
  %v1301 = vadd.f32 0.0, %v1300
  %v1302 = vpop.f32.mrf.mxu0
  %1303 = vmatprep.mubr.f32.mxu0 0.0
  %1304 = vmatmul.mubr.f32.gmra.mxu0 %v1020
  %v1305 = vpop.f32.mrf.mxu0
  %v1306 = vadd.f32 0.0, %v1305
  %v1307 = vpop.f32.mrf.mxu0
  %1308 = vmatprep.mubr.f32.mxu0 0.0
  %1309 = vmatmul.mubr.f32.gmra.mxu0 %v1023
  %v1310 = vpop.f32.mrf.mxu0
  %v1311 = vadd.f32 0.0, %v1310
  %v1312 = vpop.f32.mrf.mxu0
  %1313 = vmatprep.mubr.f32.mxu0 0.0
  %1314 = vmatmul.mubr.f32.gmra.mxu0 %v1026
  %v1315 = vpop.f32.mrf.mxu0
  %v1316 = vadd.f32 0.0, %v1315
  %v1317 = vpop.f32.mrf.mxu0
  %1318 = vmatprep.mubr.f32.mxu0 0.0
  %1319 = vmatmul.mubr.f32.gmra.mxu0 %v1029
  %v1320 = vpop.f32.mrf.mxu0
  %v1321 = vadd.f32 0.0, %v1320
  %v1322 = vpop.f32.mrf.mxu0
  %1323 = vmatprep.mubr.f32.mxu0 0.0
  %1324 = vmatmul.mubr.f32.gmra.mxu0 %v1032
  %v1325 = vpop.f32.mrf.mxu0
  %v1326 = vadd.f32 0.0, %v1325
  %v1327 = vpop.f32.mrf.mxu0
  %1328 = vmatprep.mubr.f32.mxu0 0.0
  %1329 = vmatmul.mubr.f32.gmra.mxu0 %v1035
  %v1330 = vpop.f32.mrf.mxu0
  %v1331 = vadd.f32 0.0, %v1330
  %v1332 = vpop.f32.mrf.mxu0
  %1333 = vmatprep.mubr.f32.mxu0 0.0
  %1334 = vmatmul.mubr.f32.gmra.mxu0 %v1038
  %v1335 = vpop.f32.mrf.mxu0
  %v1336 = vadd.f32 0.0, %v1335
  %v1337 = vpop.f32.mrf.mxu0
  %1338 = vmatprep.mubr.f32.mxu0 0.0
  %1339 = vmatmul.mubr.f32.gmra.mxu0 %v1041
  %v1340 = vpop.f32.mrf.mxu0
  %v1341 = vadd.f32 0.0, %v1340
  %v1342 = vpop.f32.mrf.mxu0
  %1343 = vmatprep.mubr.f32.mxu0 0.0
  %1344 = vmatmul.mubr.f32.gmra.mxu0 %v1044
  %v1345 = vpop.f32.mrf.mxu0
  %v1346 = vadd.f32 0.0, %v1345
  %v1347 = vpop.f32.mrf.mxu0
  %1348 = vmatprep.mubr.f32.mxu0 0.0
  %1349 = vmatmul.mubr.f32.gmra.mxu0 %v1047
  %v1350 = vpop.f32.mrf.mxu0
  %v1351 = vadd.f32 0.0, %v1350
  %v1352 = vpop.f32.mrf.mxu0
  %1353 = vmatprep.mubr.f32.mxu0 0.0
  %1354 = vmatmul.mubr.f32.gmra.mxu0 %v1050
  %v1355 = vpop.f32.mrf.mxu0
  %v1356 = vadd.f32 0.0, %v1355
  %v1357 = vpop.f32.mrf.mxu0
  %1358 = vmatprep.mubr.f32.mxu0 0.0
  %1359 = vmatmul.mubr.f32.gmra.mxu0 %v1053
  %v1360 = vpop.f32.mrf.mxu0
  %v1361 = vadd.f32 0.0, %v1360
  %v1362 = vpop.f32.mrf.mxu0
  %1363 = vmatprep.mubr.f32.mxu0 0.0
  %1364 = vmatmul.mubr.f32.gmra.mxu0 %v1056
  %v1365 = vpop.f32.mrf.mxu0
  %v1366 = vadd.f32 0.0, %v1365
  %v1367 = vpop.f32.mrf.mxu0
  %1368 = vmatprep.mubr.f32.mxu0 0.0
  %1369 = vmatmul.mubr.f32.gmra.mxu0 %v1059
  %v1370 = vpop.f32.mrf.mxu0
  %v1371 = vadd.f32 0.0, %v1370
  %v1372 = vpop.f32.mrf.mxu0
  %1373 = vmatprep.mubr.f32.mxu0 0.0
  %1374 = vmatmul.mubr.f32.gmra.mxu0 %v1062
  %v1375 = vpop.f32.mrf.mxu0
  %v1376 = vadd.f32 0.0, %v1375
  %v1377 = vpop.f32.mrf.mxu0
  %1378 = vmatprep.mubr.f32.mxu0 0.0
  %1379 = vmatmul.mubr.f32.gmra.mxu0 %v1065
  %v1380 = vpop.f32.mrf.mxu0
  %v1381 = vadd.f32 0.0, %v1380
  %v1382 = vpop.f32.mrf.mxu0
  %1383 = vmatprep.mubr.f32.mxu0 0.0
  %1384 = vmatmul.mubr.f32.gmra.mxu0 %v1068
  %v1385 = vpop.f32.mrf.mxu0
  %v1386 = vadd.f32 0.0, %v1385
  %v1387 = vpop.f32.mrf.mxu0
  %1388 = vmatprep.mubr.f32.mxu0 0.0
  %1389 = vmatmul.mubr.f32.gmra.mxu0 %v1071
  %v1390 = vpop.f32.mrf.mxu0
  %v1391 = vadd.f32 0.0, %v1390
  %v1392 = vpop.f32.mrf.mxu0
  %1393 = vmatprep.mubr.f32.mxu0 0.0
  %1394 = vmatmul.mubr.f32.gmra.mxu0 %v1074
  %v1395 = vpop.f32.mrf.mxu0
  %v1396 = vadd.f32 0.0, %v1395
  %v1397 = vpop.f32.mrf.mxu0
  %1398 = vmatprep.mubr.f32.mxu0 0.0
  %1399 = vmatmul.mubr.f32.gmra.mxu0 %v1077
  %v1400 = vpop.f32.mrf.mxu0
  %v1401 = vadd.f32 0.0, %v1400
  %v1402 = vpop.f32.mrf.mxu0
  %1403 = vmatprep.mubr.f32.mxu0 0.0
  %1404 = vmatmul.mubr.f32.gmra.mxu0 %v1080
  %v1405 = vpop.f32.mrf.mxu0
  %v1406 = vadd.f32 0.0, %v1405
  %v1407 = vpop.f32.mrf.mxu0
  %1408 = vmatprep.mubr.f32.mxu0 0.0
  %1409 = vmatmul.mubr.f32.gmra.mxu0 %v1083
  %v1410 = vpop.f32.mrf.mxu0
  %v1411 = vadd.f32 0.0, %v1410
  %v1412 = vpop.f32.mrf.mxu0
  %1413 = vmatprep.mubr.f32.mxu0 0.0
  %1414 = vmatmul.mubr.f32.gmra.mxu0 %v1086
  %v1415 = vpop.f32.mrf.mxu0
  %v1416 = vadd.f32 0.0, %v1415
  %v1417 = vpop.f32.mrf.mxu0
  %1418 = vmatprep.mubr.f32.mxu0 0.0
  %1419 = vmatmul.mubr.f32.gmra.mxu0 %v1089
  %v1420 = vpop.f32.mrf.mxu0
  %v1421 = vadd.f32 0.0, %v1420
  %v1422 = vpop.f32.mrf.mxu0
  %1423 = vmatprep.mubr.f32.mxu0 0.0
  %1424 = vmatmul.mubr.f32.gmra.mxu0 %v1092
  %v1425 = vpop.f32.mrf.mxu0
  %v1426 = vadd.f32 0.0, %v1425
  %v1427 = vpop.f32.mrf.mxu0
  %1428 = vmatprep.mubr.f32.mxu0 0.0
  %1429 = vmatmul.mubr.f32.gmra.mxu0 %v1095
  %v1430 = vpop.f32.mrf.mxu0
  %v1431 = vadd.f32 0.0, %v1430
  %v1432 = vpop.f32.mrf.mxu0
  %1433 = vmatprep.mubr.f32.mxu0 0.0
  %1434 = vmatmul.mubr.f32.gmra.mxu0 %v1098
  %v1435 = vpop.f32.mrf.mxu0
  %v1436 = vadd.f32 0.0, %v1435
  %v1437 = vpop.f32.mrf.mxu0
  %1438 = vmatprep.mubr.f32.mxu0 0.0
  %1439 = vmatmul.mubr.f32.gmra.mxu0 %v1101
  %v1440 = vpop.f32.mrf.mxu0
  %v1441 = vadd.f32 0.0, %v1440
  %v1442 = vpop.f32.mrf.mxu0
  %1443 = vmatprep.mubr.f32.mxu0 0.0
  %1444 = vmatmul.mubr.f32.gmra.mxu0 %v1104
  %v1445 = vpop.f32.mrf.mxu0
  %v1446 = vadd.f32 0.0, %v1445
  %v1447 = vpop.f32.mrf.mxu0
  %1448 = vmatprep.mubr.f32.mxu0 0.0
  %1449 = vmatmul.mubr.f32.gmra.mxu0 %v1107
  %v1450 = vpop.f32.mrf.mxu0
  %v1451 = vadd.f32 0.0, %v1450
  %v1452 = vpop.f32.mrf.mxu0
  %1453 = vmatprep.mubr.f32.mxu0 0.0
  %1454 = vmatmul.mubr.f32.gmra.mxu0 %v1110
  %v1455 = vpop.f32.mrf.mxu0
  %v1456 = vadd.f32 0.0, %v1455
  %v1457 = vpop.f32.mrf.mxu0
  %1458 = vmatprep.mubr.f32.mxu0 0.0
  %1459 = vmatmul.mubr.f32.gmra.mxu0 %v1113
  %v1460 = vpop.f32.mrf.mxu0
  %v1461 = vadd.f32 0.0, %v1460
  %v1462 = vpop.f32.mrf.mxu0
  %1463 = vmatprep.mubr.f32.mxu0 0.0
  %1464 = vmatmul.mubr.f32.gmra.mxu0 %v1116
  %v1465 = vpop.f32.mrf.mxu0
  %v1466 = vadd.f32 0.0, %v1465
  %v1467 = vpop.f32.mrf.mxu0
  %1468 = vmatprep.mubr.f32.mxu0 0.0
  %1469 = vmatmul.mubr.f32.gmra.mxu0 %v1119
  %v1470 = vpop.f32.mrf.mxu0
  %v1471 = vadd.f32 0.0, %v1470
  %v1472 = vpop.f32.mrf.mxu0
  %1473 = vmatprep.mubr.f32.mxu0 0.0
  %1474 = vmatmul.mubr.f32.gmra.mxu0 %v1122
  %v1475 = vpop.f32.mrf.mxu0
  %v1476 = vadd.f32 0.0, %v1475
  %v1477 = vpop.f32.mrf.mxu0
  %1478 = vmatprep.mubr.f32.mxu0 0.0
  %1479 = vmatmul.mubr.f32.gmra.mxu0 %v1125
  %v1480 = vpop.f32.mrf.mxu0
  %v1481 = vadd.f32 0.0, %v1480
  %v1482 = vpop.f32.mrf.mxu0
  %1483 = vmatprep.mubr.f32.mxu0 0.0
  %1484 = vmatmul.mubr.f32.gmra.mxu0 %v1128
  %v1485 = vpop.f32.mrf.mxu0
  %v1486 = vadd.f32 0.0, %v1485
  %v1487 = vpop.f32.mrf.mxu0
  %1488 = vmatprep.mubr.f32.mxu0 0.0
  %1489 = vmatmul.mubr.f32.gmra.mxu0 %v1131
  %v1490 = vpop.f32.mrf.mxu0
  %v1491 = vadd.f32 0.0, %v1490
  %v1492 = vpop.f32.mrf.mxu0
  %1493 = vmatprep.mubr.f32.mxu0 0.0
  %1494 = vmatmul.mubr.f32.gmra.mxu0 %v1134
  %v1495 = vpop.f32.mrf.mxu0
  %v1496 = vadd.f32 0.0, %v1495
  %v1497 = vpop.f32.mrf.mxu0
  %1498 = vmatprep.mubr.f32.mxu0 0.0
  %1499 = vmatmul.mubr.f32.gmra.mxu0 %v1137
  %v1500 = vpop.f32.mrf.mxu0
  %v1501 = vadd.f32 0.0, %v1500
  %v1502 = vpop.f32.mrf.mxu0
  %1503 = vmatprep.mubr.f32.mxu0 0.0
  %1504 = vmatmul.mubr.f32.gmra.mxu0 %v1140
  %v1505 = vpop.f32.mrf.mxu0
  %v1506 = vadd.f32 0.0, %v1505
  %v1507 = vpop.f32.mrf.mxu0
  %1508 = vmatprep.mubr.f32.mxu0 0.0
  %1509 = vmatmul.mubr.f32.gmra.mxu0 %v1143
  %v1510 = vpop.f32.mrf.mxu0
  %v1511 = vadd.f32 0.0, %v1510
  %v1512 = vpop.f32.mrf.mxu0
  %1513 = vmatprep.mubr.f32.mxu0 0.0
  %1514 = vmatmul.mubr.f32.gmra.mxu0 %v1146
  %v1515 = vpop.f32.mrf.mxu0
  %v1516 = vadd.f32 0.0, %v1515
  %v1517 = vpop.f32.mrf.mxu0
  %1518 = vmatprep.mubr.f32.mxu0 0.0
  %1519 = vmatmul.mubr.f32.gmra.mxu0 %v1149
  %v1520 = vpop.f32.mrf.mxu0
  %v1521 = vadd.f32 0.0, %v1520
  %v1522 = vpop.f32.mrf.mxu0
  %1523 = vmatprep.mubr.f32.mxu0 0.0
  %1524 = vmatmul.mubr.f32.gmra.mxu0 %v1152
  %v1525 = vpop.f32.mrf.mxu0
  %v1526 = vadd.f32 0.0, %v1525
  %v1527 = vpop.f32.mrf.mxu0
  %1528 = vmatprep.mubr.f32.mxu0 0.0
  %1529 = vmatmul.mubr.f32.gmra.mxu0 %v1155
  %v1530 = vpop.f32.mrf.mxu0
  %v1531 = vadd.f32 0.0, %v1530
  %v1532 = vpop.f32.mrf.mxu0
  %1533 = vmatprep.mubr.f32.mxu0 0.0
  %1534 = vmatmul.mubr.f32.gmra.mxu0 %v1158
  %v1535 = vpop.f32.mrf.mxu0
  %v1536 = vadd.f32 0.0, %v1535
  %v1537 = vpop.f32.mrf.mxu0
  %1538 = vmatprep.mubr.f32.mxu0 0.0
  %1539 = vmatmul.mubr.f32.gmra.mxu0 %v1161
  %v1540 = vpop.f32.mrf.mxu0
  %v1541 = vadd.f32 0.0, %v1540
  %v1542 = vpop.f32.mrf.mxu0
  %1543 = vmatprep.mubr.f32.mxu0 0.0
  %1544 = vmatmul.mubr.f32.gmra.mxu0 %v1164
  %v1545 = vpop.f32.mrf.mxu0
  %v1546 = vadd.f32 0.0, %v1545
  %v1547 = vpop.f32.mrf.mxu0
  %1548 = vmatprep.mubr.f32.mxu0 0.0
  %1549 = vmatmul.mubr.f32.gmra.mxu0 %v1167
  %v1550 = vpop.f32.mrf.mxu0
  %v1551 = vadd.f32 0.0, %v1550
  %v1552 = vpop.f32.mrf.mxu0
  %1553 = vdwg.mxu0
  %v1554 = vld [vmem:[%s5] sm:$0xff]
  %v1555 = vld [vmem:[%s5 + $0x8] sm:$0xff]
  %v1556 = vld [vmem:[%s5 + $0x10] sm:$0xff]
  %v1557 = vld [vmem:[%s5 + $0x18] sm:$0xff]
  %v1559 = vsel %vm137, %v715, 0
  %v1562 = vsel %vm137, %v716, 0
  %v1565 = vsel %vm137, %v717, 0
  %v1568 = vsel %vm137, %v718, 0
  %v1571 = vsel %vm137, %v719, 0
  %v1574 = vsel %vm137, %v720, 0
  %v1577 = vsel %vm137, %v721, 0
  %v1580 = vsel %vm137, %v722, 0
  %v1583 = vsel %vm137, %v723, 0
  %v1586 = vsel %vm137, %v724, 0
  %v1589 = vsel %vm137, %v725, 0
  %v1592 = vsel %vm137, %v726, 0
  %v1595 = vsel %vm137, %v727, 0
  %v1598 = vsel %vm137, %v728, 0
  %v1601 = vsel %vm137, %v729, 0
  %v1604 = vsel %vm137, %v730, 0
  %v1607 = vsel %vm137, %v731, 0
  %v1610 = vsel %vm137, %v732, 0
  %v1613 = vsel %vm137, %v733, 0
  %v1616 = vsel %vm137, %v734, 0
  %v1619 = vsel %vm137, %v735, 0
  %v1622 = vsel %vm137, %v736, 0
  %v1625 = vsel %vm137, %v737, 0
  %v1628 = vsel %vm137, %v738, 0
  %v1631 = vsel %vm137, %v739, 0
  %v1634 = vsel %vm137, %v740, 0
  %v1637 = vsel %vm137, %v741, 0
  %v1640 = vsel %vm137, %v742, 0
  %v1643 = vsel %vm137, %v743, 0
  %v1646 = vsel %vm137, %v744, 0
  %v1649 = vsel %vm137, %v745, 0
  %v1652 = vsel %vm137, %v746, 0
  %v1655 = vsel %vm137, %v747, 0
  %v1658 = vsel %vm137, %v748, 0
  %v1661 = vsel %vm137, %v749, 0
  %v1664 = vsel %vm137, %v750, 0
  %v1667 = vsel %vm137, %v751, 0
  %v1670 = vsel %vm137, %v752, 0
  %v1673 = vsel %vm137, %v753, 0
  %v1676 = vsel %vm137, %v754, 0
  %v1679 = vsel %vm137, %v755, 0
  %v1682 = vsel %vm137, %v756, 0
  %v1685 = vsel %vm137, %v757, 0
  %v1688 = vsel %vm137, %v758, 0
  %v1691 = vsel %vm137, %v759, 0
  %v1694 = vsel %vm137, %v760, 0
  %v1697 = vsel %vm137, %v761, 0
  %v1700 = vsel %vm137, %v762, 0
  %v1703 = vsel %vm137, %v763, 0
  %v1706 = vsel %vm137, %v764, 0
  %v1709 = vsel %vm137, %v765, 0
  %v1712 = vsel %vm137, %v766, 0
  %v1715 = vsel %vm137, %v767, 0
  %v1718 = vsel %vm137, %v768, 0
  %v1721 = vsel %vm137, %v769, 0
  %v1724 = vsel %vm137, %v770, 0
  %v1727 = vsel %vm137, %v771, 0
  %v1730 = vsel %vm137, %v772, 0
  %v1733 = vsel %vm137, %v773, 0
  %v1736 = vsel %vm137, %v774, 0
  %v1739 = vsel %vm137, %v775, 0
  %v1742 = vsel %vm137, %v776, 0
  %v1745 = vsel %vm137, %v777, 0
  %v1748 = vsel %vm137, %v778, 0
  %1750 = vmatprep.subr.mxu0 0.0
  %1751 = vmatpush1.msra.mxu0 0.0
  %1752 = vmatprep.subr.mxu0 0.0
  %1753 = vmatpush1.msra.mxu0 0.0
  %1754 = vmatprep.subr.mxu0 0.0
  %1755 = vmatpush1.msra.mxu0 0.0
  %1756 = vmatprep.subr.mxu0 0.0
  %1757 = vmatpush1.msra.mxu0 0.0
  %1758 = vmatprep.subr.mxu0 0.0
  %1759 = vmatpush1.msra.mxu0 0.0
  %1760 = vmatprep.subr.mxu0 0.0
  %1761 = vmatpush1.msra.mxu0 0.0
  %1762 = vmatprep.subr.mxu0 0.0
  %1763 = vmatpush1.msra.mxu0 0.0
  %1764 = vmatprep.subr.mxu0 0.0
  %1765 = vmatpush1.msra.mxu0 0.0
  %1766 = vmatprep.subr.mxu0 0.0
  %1767 = vmatpush1.msra.mxu0 0.0
  %1768 = vmatprep.subr.mxu0 0.0
  %1769 = vmatpush1.msra.mxu0 0.0
  %1770 = vmatprep.subr.mxu0 0.0
  %1771 = vmatpush1.msra.mxu0 0.0
  %1772 = vmatprep.subr.mxu0 0.0
  %1773 = vmatpush1.msra.mxu0 0.0
  %1774 = vmatprep.subr.mxu0 0.0
  %1775 = vmatpush1.msra.mxu0 %v1557
  %1776 = vmatprep.subr.mxu0 0.0
  %1777 = vmatpush1.msra.mxu0 %v1556
  %1778 = vmatprep.subr.mxu0 0.0
  %1779 = vmatpush1.msra.mxu0 %v1555
  %1780 = vmatprep.subr.mxu0 0.0
  %1781 = vmatpush1.msra.mxu0 %v1554
  %1782 = vmatprep.subr.mxu0 0.0
  %1783 = vmatpush2.msra.mxu0 0.0
  %1784 = vmatprep.subr.mxu0 0.0
  %1785 = vmatpush2.msra.mxu0 0.0
  %1786 = vmatprep.subr.mxu0 0.0
  %1787 = vmatpush2.msra.mxu0 0.0
  %1788 = vmatprep.subr.mxu0 0.0
  %1789 = vmatpush2.msra.mxu0 0.0
  %1790 = vmatprep.subr.mxu0 0.0
  %1791 = vmatpush2.msra.mxu0 0.0
  %1792 = vmatprep.subr.mxu0 0.0
  %1793 = vmatpush2.msra.mxu0 0.0
  %1794 = vmatprep.subr.mxu0 0.0
  %1795 = vmatpush2.msra.mxu0 0.0
  %1796 = vmatprep.subr.mxu0 0.0
  %1797 = vmatpush2.msra.mxu0 0.0
  %1798 = vmatprep.subr.mxu0 0.0
  %1799 = vmatpush2.msra.mxu0 0.0
  %1800 = vmatprep.subr.mxu0 0.0
  %1801 = vmatpush2.msra.mxu0 0.0
  %1802 = vmatprep.subr.mxu0 0.0
  %1803 = vmatpush2.msra.mxu0 0.0
  %1804 = vmatprep.subr.mxu0 0.0
  %1805 = vmatpush2.msra.mxu0 0.0
  %1806 = vmatprep.subr.mxu0 0.0
  %1807 = vmatpush2.msra.mxu0 0.0
  %1808 = vmatprep.subr.mxu0 0.0
  %1809 = vmatpush2.msra.mxu0 0.0
  %1810 = vmatprep.subr.mxu0 0.0
  %1811 = vmatpush2.msra.mxu0 0.0
  %1812 = vmatprep.subr.mxu0 0.0
  %1813 = vmatpush2.msra.mxu0 0.0
  %1814 = vmatprep.mubr.f32.mxu0 0.0
  %1815 = vmatmul.mubr.f32.gmra.mxu0 %v1559
  %v1816 = vpop.f32.mrf.mxu0
  %v1817 = vadd.f32 %v1236, %v1816
  %v1818 = vpop.f32.mrf.mxu0
  %1819 = vmatprep.mubr.f32.mxu0 0.0
  %1820 = vmatmul.mubr.f32.gmra.mxu0 %v1562
  %v1821 = vpop.f32.mrf.mxu0
  %v1822 = vadd.f32 %v1241, %v1821
  %v1823 = vpop.f32.mrf.mxu0
  %1824 = vmatprep.mubr.f32.mxu0 0.0
  %1825 = vmatmul.mubr.f32.gmra.mxu0 %v1565
  %v1826 = vpop.f32.mrf.mxu0
  %v1827 = vadd.f32 %v1246, %v1826
  %v1828 = vpop.f32.mrf.mxu0
  %1829 = vmatprep.mubr.f32.mxu0 0.0
  %1830 = vmatmul.mubr.f32.gmra.mxu0 %v1568
  %v1831 = vpop.f32.mrf.mxu0
  %v1832 = vadd.f32 %v1251, %v1831
  %v1833 = vpop.f32.mrf.mxu0
  %1834 = vmatprep.mubr.f32.mxu0 0.0
  %1835 = vmatmul.mubr.f32.gmra.mxu0 %v1571
  %v1836 = vpop.f32.mrf.mxu0
  %v1837 = vadd.f32 %v1256, %v1836
  %v1838 = vpop.f32.mrf.mxu0
  %1839 = vmatprep.mubr.f32.mxu0 0.0
  %1840 = vmatmul.mubr.f32.gmra.mxu0 %v1574
  %v1841 = vpop.f32.mrf.mxu0
  %v1842 = vadd.f32 %v1261, %v1841
  %v1843 = vpop.f32.mrf.mxu0
  %1844 = vmatprep.mubr.f32.mxu0 0.0
  %1845 = vmatmul.mubr.f32.gmra.mxu0 %v1577
  %v1846 = vpop.f32.mrf.mxu0
  %v1847 = vadd.f32 %v1266, %v1846
  %v1848 = vpop.f32.mrf.mxu0
  %1849 = vmatprep.mubr.f32.mxu0 0.0
  %1850 = vmatmul.mubr.f32.gmra.mxu0 %v1580
  %v1851 = vpop.f32.mrf.mxu0
  %v1852 = vadd.f32 %v1271, %v1851
  %v1853 = vpop.f32.mrf.mxu0
  %1854 = vmatprep.mubr.f32.mxu0 0.0
  %1855 = vmatmul.mubr.f32.gmra.mxu0 %v1583
  %v1856 = vpop.f32.mrf.mxu0
  %v1857 = vadd.f32 %v1276, %v1856
  %v1858 = vpop.f32.mrf.mxu0
  %1859 = vmatprep.mubr.f32.mxu0 0.0
  %1860 = vmatmul.mubr.f32.gmra.mxu0 %v1586
  %v1861 = vpop.f32.mrf.mxu0
  %v1862 = vadd.f32 %v1281, %v1861
  %v1863 = vpop.f32.mrf.mxu0
  %1864 = vmatprep.mubr.f32.mxu0 0.0
  %1865 = vmatmul.mubr.f32.gmra.mxu0 %v1589
  %v1866 = vpop.f32.mrf.mxu0
  %v1867 = vadd.f32 %v1286, %v1866
  %v1868 = vpop.f32.mrf.mxu0
  %1869 = vmatprep.mubr.f32.mxu0 0.0
  %1870 = vmatmul.mubr.f32.gmra.mxu0 %v1592
  %v1871 = vpop.f32.mrf.mxu0
  %v1872 = vadd.f32 %v1291, %v1871
  %v1873 = vpop.f32.mrf.mxu0
  %1874 = vmatprep.mubr.f32.mxu0 0.0
  %1875 = vmatmul.mubr.f32.gmra.mxu0 %v1595
  %v1876 = vpop.f32.mrf.mxu0
  %v1877 = vadd.f32 %v1296, %v1876
  %v1878 = vpop.f32.mrf.mxu0
  %1879 = vmatprep.mubr.f32.mxu0 0.0
  %1880 = vmatmul.mubr.f32.gmra.mxu0 %v1598
  %v1881 = vpop.f32.mrf.mxu0
  %v1882 = vadd.f32 %v1301, %v1881
  %v1883 = vpop.f32.mrf.mxu0
  %1884 = vmatprep.mubr.f32.mxu0 0.0
  %1885 = vmatmul.mubr.f32.gmra.mxu0 %v1601
  %v1886 = vpop.f32.mrf.mxu0
  %v1887 = vadd.f32 %v1306, %v1886
  %v1888 = vpop.f32.mrf.mxu0
  %1889 = vmatprep.mubr.f32.mxu0 0.0
  %1890 = vmatmul.mubr.f32.gmra.mxu0 %v1604
  %v1891 = vpop.f32.mrf.mxu0
  %v1892 = vadd.f32 %v1311, %v1891
  %v1893 = vpop.f32.mrf.mxu0
  %1894 = vmatprep.mubr.f32.mxu0 0.0
  %1895 = vmatmul.mubr.f32.gmra.mxu0 %v1607
  %v1896 = vpop.f32.mrf.mxu0
  %v1897 = vadd.f32 %v1316, %v1896
  %v1898 = vpop.f32.mrf.mxu0
  %1899 = vmatprep.mubr.f32.mxu0 0.0
  %1900 = vmatmul.mubr.f32.gmra.mxu0 %v1610
  %v1901 = vpop.f32.mrf.mxu0
  %v1902 = vadd.f32 %v1321, %v1901
  %v1903 = vpop.f32.mrf.mxu0
  %1904 = vmatprep.mubr.f32.mxu0 0.0
  %1905 = vmatmul.mubr.f32.gmra.mxu0 %v1613
  %v1906 = vpop.f32.mrf.mxu0
  %v1907 = vadd.f32 %v1326, %v1906
  %v1908 = vpop.f32.mrf.mxu0
  %1909 = vmatprep.mubr.f32.mxu0 0.0
  %1910 = vmatmul.mubr.f32.gmra.mxu0 %v1616
  %v1911 = vpop.f32.mrf.mxu0
  %v1912 = vadd.f32 %v1331, %v1911
  %v1913 = vpop.f32.mrf.mxu0
  %1914 = vmatprep.mubr.f32.mxu0 0.0
  %1915 = vmatmul.mubr.f32.gmra.mxu0 %v1619
  %v1916 = vpop.f32.mrf.mxu0
  %v1917 = vadd.f32 %v1336, %v1916
  %v1918 = vpop.f32.mrf.mxu0
  %1919 = vmatprep.mubr.f32.mxu0 0.0
  %1920 = vmatmul.mubr.f32.gmra.mxu0 %v1622
  %v1921 = vpop.f32.mrf.mxu0
  %v1922 = vadd.f32 %v1341, %v1921
  %v1923 = vpop.f32.mrf.mxu0
  %1924 = vmatprep.mubr.f32.mxu0 0.0
  %1925 = vmatmul.mubr.f32.gmra.mxu0 %v1625
  %v1926 = vpop.f32.mrf.mxu0
  %v1927 = vadd.f32 %v1346, %v1926
  %v1928 = vpop.f32.mrf.mxu0
  %1929 = vmatprep.mubr.f32.mxu0 0.0
  %1930 = vmatmul.mubr.f32.gmra.mxu0 %v1628
  %v1931 = vpop.f32.mrf.mxu0
  %v1932 = vadd.f32 %v1351, %v1931
  %v1933 = vpop.f32.mrf.mxu0
  %1934 = vmatprep.mubr.f32.mxu0 0.0
  %1935 = vmatmul.mubr.f32.gmra.mxu0 %v1631
  %v1936 = vpop.f32.mrf.mxu0
  %v1937 = vadd.f32 %v1356, %v1936
  %v1938 = vpop.f32.mrf.mxu0
  %1939 = vmatprep.mubr.f32.mxu0 0.0
  %1940 = vmatmul.mubr.f32.gmra.mxu0 %v1634
  %v1941 = vpop.f32.mrf.mxu0
  %v1942 = vadd.f32 %v1361, %v1941
  %v1943 = vpop.f32.mrf.mxu0
  %1944 = vmatprep.mubr.f32.mxu0 0.0
  %1945 = vmatmul.mubr.f32.gmra.mxu0 %v1637
  %v1946 = vpop.f32.mrf.mxu0
  %v1947 = vadd.f32 %v1366, %v1946
  %v1948 = vpop.f32.mrf.mxu0
  %1949 = vmatprep.mubr.f32.mxu0 0.0
  %1950 = vmatmul.mubr.f32.gmra.mxu0 %v1640
  %v1951 = vpop.f32.mrf.mxu0
  %v1952 = vadd.f32 %v1371, %v1951
  %v1953 = vpop.f32.mrf.mxu0
  %1954 = vmatprep.mubr.f32.mxu0 0.0
  %1955 = vmatmul.mubr.f32.gmra.mxu0 %v1643
  %v1956 = vpop.f32.mrf.mxu0
  %v1957 = vadd.f32 %v1376, %v1956
  %v1958 = vpop.f32.mrf.mxu0
  %1959 = vmatprep.mubr.f32.mxu0 0.0
  %1960 = vmatmul.mubr.f32.gmra.mxu0 %v1646
  %v1961 = vpop.f32.mrf.mxu0
  %v1962 = vadd.f32 %v1381, %v1961
  %v1963 = vpop.f32.mrf.mxu0
  %1964 = vmatprep.mubr.f32.mxu0 0.0
  %1965 = vmatmul.mubr.f32.gmra.mxu0 %v1649
  %v1966 = vpop.f32.mrf.mxu0
  %v1967 = vadd.f32 %v1386, %v1966
  %v1968 = vpop.f32.mrf.mxu0
  %1969 = vmatprep.mubr.f32.mxu0 0.0
  %1970 = vmatmul.mubr.f32.gmra.mxu0 %v1652
  %v1971 = vpop.f32.mrf.mxu0
  %v1972 = vadd.f32 %v1391, %v1971
  %v1973 = vpop.f32.mrf.mxu0
  %1974 = vmatprep.mubr.f32.mxu0 0.0
  %1975 = vmatmul.mubr.f32.gmra.mxu0 %v1655
  %v1976 = vpop.f32.mrf.mxu0
  %v1977 = vadd.f32 %v1396, %v1976
  %v1978 = vpop.f32.mrf.mxu0
  %1979 = vmatprep.mubr.f32.mxu0 0.0
  %1980 = vmatmul.mubr.f32.gmra.mxu0 %v1658
  %v1981 = vpop.f32.mrf.mxu0
  %v1982 = vadd.f32 %v1401, %v1981
  %v1983 = vpop.f32.mrf.mxu0
  %1984 = vmatprep.mubr.f32.mxu0 0.0
  %1985 = vmatmul.mubr.f32.gmra.mxu0 %v1661
  %v1986 = vpop.f32.mrf.mxu0
  %v1987 = vadd.f32 %v1406, %v1986
  %v1988 = vpop.f32.mrf.mxu0
  %1989 = vmatprep.mubr.f32.mxu0 0.0
  %1990 = vmatmul.mubr.f32.gmra.mxu0 %v1664
  %v1991 = vpop.f32.mrf.mxu0
  %v1992 = vadd.f32 %v1411, %v1991
  %v1993 = vpop.f32.mrf.mxu0
  %1994 = vmatprep.mubr.f32.mxu0 0.0
  %1995 = vmatmul.mubr.f32.gmra.mxu0 %v1667
  %v1996 = vpop.f32.mrf.mxu0
  %v1997 = vadd.f32 %v1416, %v1996
  %v1998 = vpop.f32.mrf.mxu0
  %1999 = vmatprep.mubr.f32.mxu0 0.0
  %2000 = vmatmul.mubr.f32.gmra.mxu0 %v1670
  %v2001 = vpop.f32.mrf.mxu0
  %v2002 = vadd.f32 %v1421, %v2001
  %v2003 = vpop.f32.mrf.mxu0
  %2004 = vmatprep.mubr.f32.mxu0 0.0
  %2005 = vmatmul.mubr.f32.gmra.mxu0 %v1673
  %v2006 = vpop.f32.mrf.mxu0
  %v2007 = vadd.f32 %v1426, %v2006
  %v2008 = vpop.f32.mrf.mxu0
  %2009 = vmatprep.mubr.f32.mxu0 0.0
  %2010 = vmatmul.mubr.f32.gmra.mxu0 %v1676
  %v2011 = vpop.f32.mrf.mxu0
  %v2012 = vadd.f32 %v1431, %v2011
  %v2013 = vpop.f32.mrf.mxu0
  %2014 = vmatprep.mubr.f32.mxu0 0.0
  %2015 = vmatmul.mubr.f32.gmra.mxu0 %v1679
  %v2016 = vpop.f32.mrf.mxu0
  %v2017 = vadd.f32 %v1436, %v2016
  %v2018 = vpop.f32.mrf.mxu0
  %2019 = vmatprep.mubr.f32.mxu0 0.0
  %2020 = vmatmul.mubr.f32.gmra.mxu0 %v1682
  %v2021 = vpop.f32.mrf.mxu0
  %v2022 = vadd.f32 %v1441, %v2021
  %v2023 = vpop.f32.mrf.mxu0
  %2024 = vmatprep.mubr.f32.mxu0 0.0
  %2025 = vmatmul.mubr.f32.gmra.mxu0 %v1685
  %v2026 = vpop.f32.mrf.mxu0
  %v2027 = vadd.f32 %v1446, %v2026
  %v2028 = vpop.f32.mrf.mxu0
  %2029 = vmatprep.mubr.f32.mxu0 0.0
  %2030 = vmatmul.mubr.f32.gmra.mxu0 %v1688
  %v2031 = vpop.f32.mrf.mxu0
  %v2032 = vadd.f32 %v1451, %v2031
  %v2033 = vpop.f32.mrf.mxu0
  %2034 = vmatprep.mubr.f32.mxu0 0.0
  %2035 = vmatmul.mubr.f32.gmra.mxu0 %v1691
  %v2036 = vpop.f32.mrf.mxu0
  %v2037 = vadd.f32 %v1456, %v2036
  %v2038 = vpop.f32.mrf.mxu0
  %2039 = vmatprep.mubr.f32.mxu0 0.0
  %2040 = vmatmul.mubr.f32.gmra.mxu0 %v1694
  %v2041 = vpop.f32.mrf.mxu0
  %v2042 = vadd.f32 %v1461, %v2041
  %v2043 = vpop.f32.mrf.mxu0
  %2044 = vmatprep.mubr.f32.mxu0 0.0
  %2045 = vmatmul.mubr.f32.gmra.mxu0 %v1697
  %v2046 = vpop.f32.mrf.mxu0
  %v2047 = vadd.f32 %v1466, %v2046
  %v2048 = vpop.f32.mrf.mxu0
  %2049 = vmatprep.mubr.f32.mxu0 0.0
  %2050 = vmatmul.mubr.f32.gmra.mxu0 %v1700
  %v2051 = vpop.f32.mrf.mxu0
  %v2052 = vadd.f32 %v1471, %v2051
  %v2053 = vpop.f32.mrf.mxu0
  %2054 = vmatprep.mubr.f32.mxu0 0.0
  %2055 = vmatmul.mubr.f32.gmra.mxu0 %v1703
  %v2056 = vpop.f32.mrf.mxu0
  %v2057 = vadd.f32 %v1476, %v2056
  %v2058 = vpop.f32.mrf.mxu0
  %2059 = vmatprep.mubr.f32.mxu0 0.0
  %2060 = vmatmul.mubr.f32.gmra.mxu0 %v1706
  %v2061 = vpop.f32.mrf.mxu0
  %v2062 = vadd.f32 %v1481, %v2061
  %v2063 = vpop.f32.mrf.mxu0
  %2064 = vmatprep.mubr.f32.mxu0 0.0
  %2065 = vmatmul.mubr.f32.gmra.mxu0 %v1709
  %v2066 = vpop.f32.mrf.mxu0
  %v2067 = vadd.f32 %v1486, %v2066
  %v2068 = vpop.f32.mrf.mxu0
  %2069 = vmatprep.mubr.f32.mxu0 0.0
  %2070 = vmatmul.mubr.f32.gmra.mxu0 %v1712
  %v2071 = vpop.f32.mrf.mxu0
  %v2072 = vadd.f32 %v1491, %v2071
  %v2073 = vpop.f32.mrf.mxu0
  %2074 = vmatprep.mubr.f32.mxu0 0.0
  %2075 = vmatmul.mubr.f32.gmra.mxu0 %v1715
  %v2076 = vpop.f32.mrf.mxu0
  %v2077 = vadd.f32 %v1496, %v2076
  %v2078 = vpop.f32.mrf.mxu0
  %2079 = vmatprep.mubr.f32.mxu0 0.0
  %2080 = vmatmul.mubr.f32.gmra.mxu0 %v1718
  %v2081 = vpop.f32.mrf.mxu0
  %v2082 = vadd.f32 %v1501, %v2081
  %v2083 = vpop.f32.mrf.mxu0
  %2084 = vmatprep.mubr.f32.mxu0 0.0
  %2085 = vmatmul.mubr.f32.gmra.mxu0 %v1721
  %v2086 = vpop.f32.mrf.mxu0
  %v2087 = vadd.f32 %v1506, %v2086
  %v2088 = vpop.f32.mrf.mxu0
  %2089 = vmatprep.mubr.f32.mxu0 0.0
  %2090 = vmatmul.mubr.f32.gmra.mxu0 %v1724
  %v2091 = vpop.f32.mrf.mxu0
  %v2092 = vadd.f32 %v1511, %v2091
  %v2093 = vpop.f32.mrf.mxu0
  %2094 = vmatprep.mubr.f32.mxu0 0.0
  %2095 = vmatmul.mubr.f32.gmra.mxu0 %v1727
  %v2096 = vpop.f32.mrf.mxu0
  %v2097 = vadd.f32 %v1516, %v2096
  %v2098 = vpop.f32.mrf.mxu0
  %2099 = vmatprep.mubr.f32.mxu0 0.0
  %2100 = vmatmul.mubr.f32.gmra.mxu0 %v1730
  %v2101 = vpop.f32.mrf.mxu0
  %v2102 = vadd.f32 %v1521, %v2101
  %v2103 = vpop.f32.mrf.mxu0
  %2104 = vmatprep.mubr.f32.mxu0 0.0
  %2105 = vmatmul.mubr.f32.gmra.mxu0 %v1733
  %v2106 = vpop.f32.mrf.mxu0
  %v2107 = vadd.f32 %v1526, %v2106
  %v2108 = vpop.f32.mrf.mxu0
  %2109 = vmatprep.mubr.f32.mxu0 0.0
  %2110 = vmatmul.mubr.f32.gmra.mxu0 %v1736
  %v2111 = vpop.f32.mrf.mxu0
  %v2112 = vadd.f32 %v1531, %v2111
  %v2113 = vpop.f32.mrf.mxu0
  %2114 = vmatprep.mubr.f32.mxu0 0.0
  %2115 = vmatmul.mubr.f32.gmra.mxu0 %v1739
  %v2116 = vpop.f32.mrf.mxu0
  %v2117 = vadd.f32 %v1536, %v2116
  %v2118 = vpop.f32.mrf.mxu0
  %2119 = vmatprep.mubr.f32.mxu0 0.0
  %2120 = vmatmul.mubr.f32.gmra.mxu0 %v1742
  %v2121 = vpop.f32.mrf.mxu0
  %v2122 = vadd.f32 %v1541, %v2121
  %v2123 = vpop.f32.mrf.mxu0
  %2124 = vmatprep.mubr.f32.mxu0 0.0
  %2125 = vmatmul.mubr.f32.gmra.mxu0 %v1745
  %v2126 = vpop.f32.mrf.mxu0
  %v2127 = vadd.f32 %v1546, %v2126
  %v2128 = vpop.f32.mrf.mxu0
  %2129 = vmatprep.mubr.f32.mxu0 0.0
  %2130 = vmatmul.mubr.f32.gmra.mxu0 %v1748
  %v2131 = vpop.f32.mrf.mxu0
  %v2132 = vadd.f32 %v1551, %v2131
  %v2133 = vpop.f32.mrf.mxu0
  %2134 = vdwg.mxu0
  %v2135 = vld [vmem:[%s7] sm:$0x1]
  %v2137 = vlaneseq
  %v2138 = vshrl.u32 %v2137, 7
  %v2139 = vsub.s32 0, %v2138
  %v2140 = vrot.slane %v2135, %v2139
  %v2142 = vadd.f32 %v1817, %v2140
  %v2143 = vadd.f32 %v1822, %v2140
  %v2144 = vadd.f32 %v1827, %v2140
  %v2145 = vadd.f32 %v1832, %v2140
  %v2146 = vadd.f32 %v1837, %v2140
  %v2147 = vadd.f32 %v1842, %v2140
  %v2148 = vadd.f32 %v1847, %v2140
  %v2149 = vadd.f32 %v1852, %v2140
  %v2150 = vadd.f32 %v1857, %v2140
  %v2151 = vadd.f32 %v1862, %v2140
  %v2152 = vadd.f32 %v1867, %v2140
  %v2153 = vadd.f32 %v1872, %v2140
  %v2154 = vadd.f32 %v1877, %v2140
  %v2155 = vadd.f32 %v1882, %v2140
  %v2156 = vadd.f32 %v1887, %v2140
  %v2157 = vadd.f32 %v1892, %v2140
  %v2158 = vadd.f32 %v1897, %v2140
  %v2159 = vadd.f32 %v1902, %v2140
  %v2160 = vadd.f32 %v1907, %v2140
  %v2161 = vadd.f32 %v1912, %v2140
  %v2162 = vadd.f32 %v1917, %v2140
  %v2163 = vadd.f32 %v1922, %v2140
  %v2164 = vadd.f32 %v1927, %v2140
  %v2165 = vadd.f32 %v1932, %v2140
  %v2166 = vadd.f32 %v1937, %v2140
  %v2167 = vadd.f32 %v1942, %v2140
  %v2168 = vadd.f32 %v1947, %v2140
  %v2169 = vadd.f32 %v1952, %v2140
  %v2170 = vadd.f32 %v1957, %v2140
  %v2171 = vadd.f32 %v1962, %v2140
  %v2172 = vadd.f32 %v1967, %v2140
  %v2173 = vadd.f32 %v1972, %v2140
  %v2174 = vadd.f32 %v1977, %v2140
  %v2175 = vadd.f32 %v1982, %v2140
  %v2176 = vadd.f32 %v1987, %v2140
  %v2177 = vadd.f32 %v1992, %v2140
  %v2178 = vadd.f32 %v1997, %v2140
  %v2179 = vadd.f32 %v2002, %v2140
  %v2180 = vadd.f32 %v2007, %v2140
  %v2181 = vadd.f32 %v2012, %v2140
  %v2182 = vadd.f32 %v2017, %v2140
  %v2183 = vadd.f32 %v2022, %v2140
  %v2184 = vadd.f32 %v2027, %v2140
  %v2185 = vadd.f32 %v2032, %v2140
  %v2186 = vadd.f32 %v2037, %v2140
  %v2187 = vadd.f32 %v2042, %v2140
  %v2188 = vadd.f32 %v2047, %v2140
  %v2189 = vadd.f32 %v2052, %v2140
  %v2190 = vadd.f32 %v2057, %v2140
  %v2191 = vadd.f32 %v2062, %v2140
  %v2192 = vadd.f32 %v2067, %v2140
  %v2193 = vadd.f32 %v2072, %v2140
  %v2194 = vadd.f32 %v2077, %v2140
  %v2195 = vadd.f32 %v2082, %v2140
  %v2196 = vadd.f32 %v2087, %v2140
  %v2197 = vadd.f32 %v2092, %v2140
  %v2198 = vadd.f32 %v2097, %v2140
  %v2199 = vadd.f32 %v2102, %v2140
  %v2200 = vadd.f32 %v2107, %v2140
  %v2201 = vadd.f32 %v2112, %v2140
  %v2202 = vadd.f32 %v2117, %v2140
  %v2203 = vadd.f32 %v2122, %v2140
  %v2204 = vadd.f32 %v2127, %v2140
  %v2205 = vadd.f32 %v2132, %v2140
  %v2206 = vmax.f32 %v2142, 0.0
  %v2207 = vmax.f32 %v2143, 0.0
  %v2208 = vmax.f32 %v2144, 0.0
  %v2209 = vmax.f32 %v2145, 0.0
  %v2210 = vmax.f32 %v2146, 0.0
  %v2211 = vmax.f32 %v2147, 0.0
  %v2212 = vmax.f32 %v2148, 0.0
  %v2213 = vmax.f32 %v2149, 0.0
  %v2214 = vmax.f32 %v2150, 0.0
  %v2215 = vmax.f32 %v2151, 0.0
  %v2216 = vmax.f32 %v2152, 0.0
  %v2217 = vmax.f32 %v2153, 0.0
  %v2218 = vmax.f32 %v2154, 0.0
  %v2219 = vmax.f32 %v2155, 0.0
  %v2220 = vmax.f32 %v2156, 0.0
  %v2221 = vmax.f32 %v2157, 0.0
  %v2222 = vmax.f32 %v2158, 0.0
  %v2223 = vmax.f32 %v2159, 0.0
  %v2224 = vmax.f32 %v2160, 0.0
  %v2225 = vmax.f32 %v2161, 0.0
  %v2226 = vmax.f32 %v2162, 0.0
  %v2227 = vmax.f32 %v2163, 0.0
  %v2228 = vmax.f32 %v2164, 0.0
  %v2229 = vmax.f32 %v2165, 0.0
  %v2230 = vmax.f32 %v2166, 0.0
  %v2231 = vmax.f32 %v2167, 0.0
  %v2232 = vmax.f32 %v2168, 0.0
  %v2233 = vmax.f32 %v2169, 0.0
  %v2234 = vmax.f32 %v2170, 0.0
  %v2235 = vmax.f32 %v2171, 0.0
  %v2236 = vmax.f32 %v2172, 0.0
  %v2237 = vmax.f32 %v2173, 0.0
  %v2238 = vmax.f32 %v2174, 0.0
  %v2239 = vmax.f32 %v2175, 0.0
  %v2240 = vmax.f32 %v2176, 0.0
  %v2241 = vmax.f32 %v2177, 0.0
  %v2242 = vmax.f32 %v2178, 0.0
  %v2243 = vmax.f32 %v2179, 0.0
  %v2244 = vmax.f32 %v2180, 0.0
  %v2245 = vmax.f32 %v2181, 0.0
  %v2246 = vmax.f32 %v2182, 0.0
  %v2247 = vmax.f32 %v2183, 0.0
  %v2248 = vmax.f32 %v2184, 0.0
  %v2249 = vmax.f32 %v2185, 0.0
  %v2250 = vmax.f32 %v2186, 0.0
  %v2251 = vmax.f32 %v2187, 0.0
  %v2252 = vmax.f32 %v2188, 0.0
  %v2253 = vmax.f32 %v2189, 0.0
  %v2254 = vmax.f32 %v2190, 0.0
  %v2255 = vmax.f32 %v2191, 0.0
  %v2256 = vmax.f32 %v2192, 0.0
  %v2257 = vmax.f32 %v2193, 0.0
  %v2258 = vmax.f32 %v2194, 0.0
  %v2259 = vmax.f32 %v2195, 0.0
  %v2260 = vmax.f32 %v2196, 0.0
  %v2261 = vmax.f32 %v2197, 0.0
  %v2262 = vmax.f32 %v2198, 0.0
  %v2263 = vmax.f32 %v2199, 0.0
  %v2264 = vmax.f32 %v2200, 0.0
  %v2265 = vmax.f32 %v2201, 0.0
  %v2266 = vmax.f32 %v2202, 0.0
  %v2267 = vmax.f32 %v2203, 0.0
  %v2268 = vmax.f32 %v2204, 0.0
  %v2269 = vmax.f32 %v2205, 0.0
  %2270 = vst.msk [vmem:[%s13] sm:$0xff] %vm137, %v2206
  %2271 = vst.msk [vmem:[%s13 + $0x8] sm:$0xff] %vm137, %v2207
  %2272 = vst.msk [vmem:[%s13 + $0x10] sm:$0xff] %vm137, %v2208
  %2273 = vst.msk [vmem:[%s13 + $0x18] sm:$0xff] %vm137, %v2209
  %2274 = vst.msk [vmem:[%s13 + $0x20] sm:$0xff] %vm137, %v2210
  %2275 = vst.msk [vmem:[%s13 + $0x28] sm:$0xff] %vm137, %v2211
  %2276 = vst.msk [vmem:[%s13 + $0x30] sm:$0xff] %vm137, %v2212
  %2277 = vst.msk [vmem:[%s13 + $0x38] sm:$0xff] %vm137, %v2213
  %2278 = vst.msk [vmem:[%s13 + $0x40] sm:$0xff] %vm137, %v2214
  %2279 = vst.msk [vmem:[%s13 + $0x48] sm:$0xff] %vm137, %v2215
  %2280 = vst.msk [vmem:[%s13 + $0x50] sm:$0xff] %vm137, %v2216
  %2281 = vst.msk [vmem:[%s13 + $0x58] sm:$0xff] %vm137, %v2217
  %2282 = vst.msk [vmem:[%s13 + $0x60] sm:$0xff] %vm137, %v2218
  %2283 = vst.msk [vmem:[%s13 + $0x68] sm:$0xff] %vm137, %v2219
  %2284 = vst.msk [vmem:[%s13 + $0x70] sm:$0xff] %vm137, %v2220
  %2285 = vst.msk [vmem:[%s13 + $0x78] sm:$0xff] %vm137, %v2221
  %2286 = vst.msk [vmem:[%s13 + $0x80] sm:$0xff] %vm137, %v2222
  %2287 = vst.msk [vmem:[%s13 + $0x88] sm:$0xff] %vm137, %v2223
  %2288 = vst.msk [vmem:[%s13 + $0x90] sm:$0xff] %vm137, %v2224
  %2289 = vst.msk [vmem:[%s13 + $0x98] sm:$0xff] %vm137, %v2225
  %2290 = vst.msk [vmem:[%s13 + $0xa0] sm:$0xff] %vm137, %v2226
  %2291 = vst.msk [vmem:[%s13 + $0xa8] sm:$0xff] %vm137, %v2227
  %2292 = vst.msk [vmem:[%s13 + $0xb0] sm:$0xff] %vm137, %v2228
  %2293 = vst.msk [vmem:[%s13 + $0xb8] sm:$0xff] %vm137, %v2229
  %2294 = vst.msk [vmem:[%s13 + $0xc0] sm:$0xff] %vm137, %v2230
  %2295 = vst.msk [vmem:[%s13 + $0xc8] sm:$0xff] %vm137, %v2231
  %2296 = vst.msk [vmem:[%s13 + $0xd0] sm:$0xff] %vm137, %v2232
  %2297 = vst.msk [vmem:[%s13 + $0xd8] sm:$0xff] %vm137, %v2233
  %2298 = vst.msk [vmem:[%s13 + $0xe0] sm:$0xff] %vm137, %v2234
  %2299 = vst.msk [vmem:[%s13 + $0xe8] sm:$0xff] %vm137, %v2235
  %2300 = vst.msk [vmem:[%s13 + $0xf0] sm:$0xff] %vm137, %v2236
  %2301 = vst.msk [vmem:[%s13 + $0xf8] sm:$0xff] %vm137, %v2237
  %2302 = vst.msk [vmem:[%s13 + $0x100] sm:$0xff] %vm137, %v2238
  %2303 = vst.msk [vmem:[%s13 + $0x108] sm:$0xff] %vm137, %v2239
  %2304 = vst.msk [vmem:[%s13 + $0x110] sm:$0xff] %vm137, %v2240
  %2305 = vst.msk [vmem:[%s13 + $0x118] sm:$0xff] %vm137, %v2241
  %2306 = vst.msk [vmem:[%s13 + $0x120] sm:$0xff] %vm137, %v2242
  %2307 = vst.msk [vmem:[%s13 + $0x128] sm:$0xff] %vm137, %v2243
  %2308 = vst.msk [vmem:[%s13 + $0x130] sm:$0xff] %vm137, %v2244
  %2309 = vst.msk [vmem:[%s13 + $0x138] sm:$0xff] %vm137, %v2245
  %2310 = vst.msk [vmem:[%s13 + $0x140] sm:$0xff] %vm137, %v2246
  %2311 = vst.msk [vmem:[%s13 + $0x148] sm:$0xff] %vm137, %v2247
  %2312 = vst.msk [vmem:[%s13 + $0x150] sm:$0xff] %vm137, %v2248
  %2313 = vst.msk [vmem:[%s13 + $0x158] sm:$0xff] %vm137, %v2249
  %2314 = vst.msk [vmem:[%s13 + $0x160] sm:$0xff] %vm137, %v2250
  %2315 = vst.msk [vmem:[%s13 + $0x168] sm:$0xff] %vm137, %v2251
  %2316 = vst.msk [vmem:[%s13 + $0x170] sm:$0xff] %vm137, %v2252
  %2317 = vst.msk [vmem:[%s13 + $0x178] sm:$0xff] %vm137, %v2253
  %2318 = vst.msk [vmem:[%s13 + $0x180] sm:$0xff] %vm137, %v2254
  %2319 = vst.msk [vmem:[%s13 + $0x188] sm:$0xff] %vm137, %v2255
  %2320 = vst.msk [vmem:[%s13 + $0x190] sm:$0xff] %vm137, %v2256
  %2321 = vst.msk [vmem:[%s13 + $0x198] sm:$0xff] %vm137, %v2257
  %2322 = vst.msk [vmem:[%s13 + $0x1a0] sm:$0xff] %vm137, %v2258
  %2323 = vst.msk [vmem:[%s13 + $0x1a8] sm:$0xff] %vm137, %v2259
  %2324 = vst.msk [vmem:[%s13 + $0x1b0] sm:$0xff] %vm137, %v2260
  %2325 = vst.msk [vmem:[%s13 + $0x1b8] sm:$0xff] %vm137, %v2261
  %2326 = vst.msk [vmem:[%s13 + $0x1c0] sm:$0xff] %vm137, %v2262
  %2327 = vst.msk [vmem:[%s13 + $0x1c8] sm:$0xff] %vm137, %v2263
  %2328 = vst.msk [vmem:[%s13 + $0x1d0] sm:$0xff] %vm137, %v2264
  %2329 = vst.msk [vmem:[%s13 + $0x1d8] sm:$0xff] %vm137, %v2265
  %2330 = vst.msk [vmem:[%s13 + $0x1e0] sm:$0xff] %vm137, %v2266
  %2331 = vst.msk [vmem:[%s13 + $0x1e8] sm:$0xff] %vm137, %v2267
  %2332 = vst.msk [vmem:[%s13 + $0x1f0] sm:$0xff] %vm137, %v2268
  %2333 = vst.msk [vmem:[%s13 + $0x1f8] sm:$0xff] %vm137, %v2269
  %v2334 = vld [vmem:[%s12] sm:$0xff]
  %v2335 = vld [vmem:[%s12 + $0x8] sm:$0xff]
  %v2336 = vld [vmem:[%s12 + $0x10] sm:$0xff]
  %v2337 = vld [vmem:[%s12 + $0x18] sm:$0xff]
  %v2338 = vld [vmem:[%s12 + $0x20] sm:$0xff]
  %v2339 = vld [vmem:[%s12 + $0x28] sm:$0xff]
  %v2340 = vld [vmem:[%s12 + $0x30] sm:$0xff]
  %v2341 = vld [vmem:[%s12 + $0x38] sm:$0xff]
  %v2342 = vld [vmem:[%s12 + $0x40] sm:$0xff]
  %v2343 = vld [vmem:[%s12 + $0x48] sm:$0xff]
  %v2344 = vld [vmem:[%s12 + $0x50] sm:$0xff]
  %v2345 = vld [vmem:[%s12 + $0x58] sm:$0xff]
  %v2346 = vld [vmem:[%s12 + $0x60] sm:$0xff]
  %v2347 = vld [vmem:[%s12 + $0x68] sm:$0xff]
  %v2348 = vld [vmem:[%s12 + $0x70] sm:$0xff]
  %v2349 = vld [vmem:[%s12 + $0x78] sm:$0xff]
  %v2350 = vld [vmem:[%s12 + $0x80] sm:$0xff]
  %v2351 = vld [vmem:[%s12 + $0x88] sm:$0xff]
  %v2352 = vld [vmem:[%s12 + $0x90] sm:$0xff]
  %v2353 = vld [vmem:[%s12 + $0x98] sm:$0xff]
  %v2354 = vld [vmem:[%s12 + $0xa0] sm:$0xff]
  %v2355 = vld [vmem:[%s12 + $0xa8] sm:$0xff]
  %v2356 = vld [vmem:[%s12 + $0xb0] sm:$0xff]
  %v2357 = vld [vmem:[%s12 + $0xb8] sm:$0xff]
  %v2358 = vld [vmem:[%s12 + $0xc0] sm:$0xff]
  %v2359 = vld [vmem:[%s12 + $0xc8] sm:$0xff]
  %v2360 = vld [vmem:[%s12 + $0xd0] sm:$0xff]
  %v2361 = vld [vmem:[%s12 + $0xd8] sm:$0xff]
  %v2362 = vld [vmem:[%s12 + $0xe0] sm:$0xff]
  %v2363 = vld [vmem:[%s12 + $0xe8] sm:$0xff]
  %v2364 = vld [vmem:[%s12 + $0xf0] sm:$0xff]
  %v2365 = vld [vmem:[%s12 + $0xf8] sm:$0xff]
  %v2366 = vmul.f32 %v46, 0.5
  %v2367 = vmul.f32 %v47, 0.5
  %v2368 = vmul.f32 %v48, 0.5
  %v2369 = vmul.f32 %v49, 0.5
  %v2370 = vmul.f32 %v50, 0.5
  %v2371 = vmul.f32 %v51, 0.5
  %v2372 = vmul.f32 %v52, 0.5
  %v2373 = vmul.f32 %v53, 0.5
  %2374 = vmatprep.subr.mxu0 0.0
  %2375 = vmatpush1.msra.mxu0 %v2221
  %2376 = vmatprep.subr.mxu0 0.0
  %2377 = vmatpush1.msra.mxu0 %v2220
  %2378 = vmatprep.subr.mxu0 0.0
  %2379 = vmatpush1.msra.mxu0 %v2219
  %2380 = vmatprep.subr.mxu0 0.0
  %2381 = vmatpush1.msra.mxu0 %v2218
  %2382 = vmatprep.subr.mxu0 0.0
  %2383 = vmatpush1.msra.mxu0 %v2217
  %2384 = vmatprep.subr.mxu0 0.0
  %2385 = vmatpush1.msra.mxu0 %v2216
  %2386 = vmatprep.subr.mxu0 0.0
  %2387 = vmatpush1.msra.mxu0 %v2215
  %2388 = vmatprep.subr.mxu0 0.0
  %2389 = vmatpush1.msra.mxu0 %v2214
  %2390 = vmatprep.subr.mxu0 0.0
  %2391 = vmatpush1.msra.mxu0 %v2213
  %2392 = vmatprep.subr.mxu0 0.0
  %2393 = vmatpush1.msra.mxu0 %v2212
  %2394 = vmatprep.subr.mxu0 0.0
  %2395 = vmatpush1.msra.mxu0 %v2211
  %2396 = vmatprep.subr.mxu0 0.0
  %2397 = vmatpush1.msra.mxu0 %v2210
  %2398 = vmatprep.subr.mxu0 0.0
  %2399 = vmatpush1.msra.mxu0 %v2209
  %2400 = vmatprep.subr.mxu0 0.0
  %2401 = vmatpush1.msra.mxu0 %v2208
  %2402 = vmatprep.subr.mxu0 0.0
  %2403 = vmatpush1.msra.mxu0 %v2207
  %2404 = vmatprep.subr.mxu0 0.0
  %2405 = vmatpush1.msra.mxu0 %v2206
  %2406 = vmatprep.subr.mxu0 0.0
  %2407 = vmatpush2.msra.mxu0 %v2237
  %2408 = vmatprep.subr.mxu0 0.0
  %2409 = vmatpush2.msra.mxu0 %v2236
  %2410 = vmatprep.subr.mxu0 0.0
  %2411 = vmatpush2.msra.mxu0 %v2235
  %2412 = vmatprep.subr.mxu0 0.0
  %2413 = vmatpush2.msra.mxu0 %v2234
  %2414 = vmatprep.subr.mxu0 0.0
  %2415 = vmatpush2.msra.mxu0 %v2233
  %2416 = vmatprep.subr.mxu0 0.0
  %2417 = vmatpush2.msra.mxu0 %v2232
  %2418 = vmatprep.subr.mxu0 0.0
  %2419 = vmatpush2.msra.mxu0 %v2231
  %2420 = vmatprep.subr.mxu0 0.0
  %2421 = vmatpush2.msra.mxu0 %v2230
  %2422 = vmatprep.subr.mxu0 0.0
  %2423 = vmatpush2.msra.mxu0 %v2229
  %2424 = vmatprep.subr.mxu0 0.0
  %2425 = vmatpush2.msra.mxu0 %v2228
  %2426 = vmatprep.subr.mxu0 0.0
  %2427 = vmatpush2.msra.mxu0 %v2227
  %2428 = vmatprep.subr.mxu0 0.0
  %2429 = vmatpush2.msra.mxu0 %v2226
  %2430 = vmatprep.subr.mxu0 0.0
  %2431 = vmatpush2.msra.mxu0 %v2225
  %2432 = vmatprep.subr.mxu0 0.0
  %2433 = vmatpush2.msra.mxu0 %v2224
  %2434 = vmatprep.subr.mxu0 0.0
  %2435 = vmatpush2.msra.mxu0 %v2223
  %2436 = vmatprep.subr.mxu0 0.0
  %2437 = vmatpush2.msra.mxu0 %v2222
  %2438 = vmatprep.mubr.f32.mxu0 %v2335
  %2439 = vmatmul.mubr.f32.gmra.mxu0 %v2334
  %v2440 = vpop.f32.mrf.mxu0
  %v2441 = vadd.f32 %v2366, %v2440
  %v2442 = vpop.f32.mrf.mxu0
  %2443 = vmatprep.mubr.f32.mxu0 %v2339
  %2444 = vmatmul.mubr.f32.gmra.mxu0 %v2338
  %v2445 = vpop.f32.mrf.mxu0
  %v2446 = vadd.f32 %v2367, %v2445
  %v2447 = vpop.f32.mrf.mxu0
  %2448 = vmatprep.mubr.f32.mxu0 %v2343
  %2449 = vmatmul.mubr.f32.gmra.mxu0 %v2342
  %v2450 = vpop.f32.mrf.mxu0
  %v2451 = vadd.f32 %v2368, %v2450
  %v2452 = vpop.f32.mrf.mxu0
  %2453 = vmatprep.mubr.f32.mxu0 %v2347
  %2454 = vmatmul.mubr.f32.gmra.mxu0 %v2346
  %v2455 = vpop.f32.mrf.mxu0
  %v2456 = vadd.f32 %v2369, %v2455
  %v2457 = vpop.f32.mrf.mxu0
  %2458 = vmatprep.mubr.f32.mxu0 %v2351
  %2459 = vmatmul.mubr.f32.gmra.mxu0 %v2350
  %v2460 = vpop.f32.mrf.mxu0
  %v2461 = vadd.f32 %v2370, %v2460
  %v2462 = vpop.f32.mrf.mxu0
  %2463 = vmatprep.mubr.f32.mxu0 %v2355
  %2464 = vmatmul.mubr.f32.gmra.mxu0 %v2354
  %v2465 = vpop.f32.mrf.mxu0
  %v2466 = vadd.f32 %v2371, %v2465
  %v2467 = vpop.f32.mrf.mxu0
  %2468 = vmatprep.mubr.f32.mxu0 %v2359
  %2469 = vmatmul.mubr.f32.gmra.mxu0 %v2358
  %v2470 = vpop.f32.mrf.mxu0
  %v2471 = vadd.f32 %v2372, %v2470
  %v2472 = vpop.f32.mrf.mxu0
  %2473 = vmatprep.mubr.f32.mxu0 %v2363
  %2474 = vmatmul.mubr.f32.gmra.mxu0 %v2362
  %v2475 = vpop.f32.mrf.mxu0
  %v2476 = vadd.f32 %v2373, %v2475
  %v2477 = vpop.f32.mrf.mxu0
  %2478 = vdwg.mxu0
  %2479 = vmatprep.subr.mxu0 0.0
  %2480 = vmatpush1.msra.mxu0 %v2253
  %2481 = vmatprep.subr.mxu0 0.0
  %2482 = vmatpush1.msra.mxu0 %v2252
  %2483 = vmatprep.subr.mxu0 0.0
  %2484 = vmatpush1.msra.mxu0 %v2251
  %2485 = vmatprep.subr.mxu0 0.0
  %2486 = vmatpush1.msra.mxu0 %v2250
  %2487 = vmatprep.subr.mxu0 0.0
  %2488 = vmatpush1.msra.mxu0 %v2249
  %2489 = vmatprep.subr.mxu0 0.0
  %2490 = vmatpush1.msra.mxu0 %v2248
  %2491 = vmatprep.subr.mxu0 0.0
  %2492 = vmatpush1.msra.mxu0 %v2247
  %2493 = vmatprep.subr.mxu0 0.0
  %2494 = vmatpush1.msra.mxu0 %v2246
  %2495 = vmatprep.subr.mxu0 0.0
  %2496 = vmatpush1.msra.mxu0 %v2245
  %2497 = vmatprep.subr.mxu0 0.0
  %2498 = vmatpush1.msra.mxu0 %v2244
  %2499 = vmatprep.subr.mxu0 0.0
  %2500 = vmatpush1.msra.mxu0 %v2243
  %2501 = vmatprep.subr.mxu0 0.0
  %2502 = vmatpush1.msra.mxu0 %v2242
  %2503 = vmatprep.subr.mxu0 0.0
  %2504 = vmatpush1.msra.mxu0 %v2241
  %2505 = vmatprep.subr.mxu0 0.0
  %2506 = vmatpush1.msra.mxu0 %v2240
  %2507 = vmatprep.subr.mxu0 0.0
  %2508 = vmatpush1.msra.mxu0 %v2239
  %2509 = vmatprep.subr.mxu0 0.0
  %2510 = vmatpush1.msra.mxu0 %v2238
  %2511 = vmatprep.subr.mxu0 0.0
  %2512 = vmatpush2.msra.mxu0 %v2269
  %2513 = vmatprep.subr.mxu0 0.0
  %2514 = vmatpush2.msra.mxu0 %v2268
  %2515 = vmatprep.subr.mxu0 0.0
  %2516 = vmatpush2.msra.mxu0 %v2267
  %2517 = vmatprep.subr.mxu0 0.0
  %2518 = vmatpush2.msra.mxu0 %v2266
  %2519 = vmatprep.subr.mxu0 0.0
  %2520 = vmatpush2.msra.mxu0 %v2265
  %2521 = vmatprep.subr.mxu0 0.0
  %2522 = vmatpush2.msra.mxu0 %v2264
  %2523 = vmatprep.subr.mxu0 0.0
  %2524 = vmatpush2.msra.mxu0 %v2263
  %2525 = vmatprep.subr.mxu0 0.0
  %2526 = vmatpush2.msra.mxu0 %v2262
  %2527 = vmatprep.subr.mxu0 0.0
  %2528 = vmatpush2.msra.mxu0 %v2261
  %2529 = vmatprep.subr.mxu0 0.0
  %2530 = vmatpush2.msra.mxu0 %v2260
  %2531 = vmatprep.subr.mxu0 0.0
  %2532 = vmatpush2.msra.mxu0 %v2259
  %2533 = vmatprep.subr.mxu0 0.0
  %2534 = vmatpush2.msra.mxu0 %v2258
  %2535 = vmatprep.subr.mxu0 0.0
  %2536 = vmatpush2.msra.mxu0 %v2257
  %2537 = vmatprep.subr.mxu0 0.0
  %2538 = vmatpush2.msra.mxu0 %v2256
  %2539 = vmatprep.subr.mxu0 0.0
  %2540 = vmatpush2.msra.mxu0 %v2255
  %2541 = vmatprep.subr.mxu0 0.0
  %2542 = vmatpush2.msra.mxu0 %v2254
  %2543 = vmatprep.mubr.f32.mxu0 %v2337
  %2544 = vmatmul.mubr.f32.gmra.mxu0 %v2336
  %v2545 = vpop.f32.mrf.mxu0
  %v2546 = vadd.f32 %v2441, %v2545
  %v2547 = vpop.f32.mrf.mxu0
  %2548 = vmatprep.mubr.f32.mxu0 %v2341
  %2549 = vmatmul.mubr.f32.gmra.mxu0 %v2340
  %v2550 = vpop.f32.mrf.mxu0
  %v2551 = vadd.f32 %v2446, %v2550
  %v2552 = vpop.f32.mrf.mxu0
  %2553 = vmatprep.mubr.f32.mxu0 %v2345
  %2554 = vmatmul.mubr.f32.gmra.mxu0 %v2344
  %v2555 = vpop.f32.mrf.mxu0
  %v2556 = vadd.f32 %v2451, %v2555
  %v2557 = vpop.f32.mrf.mxu0
  %2558 = vmatprep.mubr.f32.mxu0 %v2349
  %2559 = vmatmul.mubr.f32.gmra.mxu0 %v2348
  %v2560 = vpop.f32.mrf.mxu0
  %v2561 = vadd.f32 %v2456, %v2560
  %v2562 = vpop.f32.mrf.mxu0
  %2563 = vmatprep.mubr.f32.mxu0 %v2353
  %2564 = vmatmul.mubr.f32.gmra.mxu0 %v2352
  %v2565 = vpop.f32.mrf.mxu0
  %v2566 = vadd.f32 %v2461, %v2565
  %v2567 = vpop.f32.mrf.mxu0
  %2568 = vmatprep.mubr.f32.mxu0 %v2357
  %2569 = vmatmul.mubr.f32.gmra.mxu0 %v2356
  %v2570 = vpop.f32.mrf.mxu0
  %v2571 = vadd.f32 %v2466, %v2570
  %v2572 = vpop.f32.mrf.mxu0
  %2573 = vmatprep.mubr.f32.mxu0 %v2361
  %2574 = vmatmul.mubr.f32.gmra.mxu0 %v2360
  %v2575 = vpop.f32.mrf.mxu0
  %v2576 = vadd.f32 %v2471, %v2575
  %v2577 = vpop.f32.mrf.mxu0
  %2578 = vmatprep.mubr.f32.mxu0 %v2365
  %2579 = vmatmul.mubr.f32.gmra.mxu0 %v2364
  %v2580 = vpop.f32.mrf.mxu0
  %v2581 = vadd.f32 %v2476, %v2580
  %v2582 = vpop.f32.mrf.mxu0
  %2583 = vdwg.mxu0
  %v2584 = vld [vmem:[%s8] sm:$0xff]
  %v2585 = vld [vmem:[%s8 + $0x8] sm:$0xff]
  %v2586 = vld [vmem:[%s8 + $0x10] sm:$0xff]
  %v2587 = vld [vmem:[%s8 + $0x18] sm:$0xff]
  %v2588 = vld [vmem:[%s9] sm:$0xff]
  %v2589 = vld [vmem:[%s9 + $0x8] sm:$0xff]
  %vm2590 = vcmask 130048
  %v2592 = vsel %vm2590, %v118, 0
  %v2595 = vsel %vm2590, %v119, 0
  %v2598 = vsel %vm2590, %v120, 0
  %v2601 = vsel %vm2590, %v121, 0
  %v2604 = vsel %vm2590, %v122, 0
  %v2607 = vsel %vm2590, %v123, 0
  %v2610 = vsel %vm2590, %v124, 0
  %v2613 = vsel %vm2590, %v125, 0
  %2615 = vmatprep.subr.mxu0 0.0
  %2616 = vmatpush1.msra.mxu0 0.0
  %2617 = vmatprep.subr.mxu0 0.0
  %2618 = vmatpush1.msra.mxu0 0.0
  %2619 = vmatprep.subr.mxu0 0.0
  %2620 = vmatpush1.msra.mxu0 0.0
  %2621 = vmatprep.subr.mxu0 0.0
  %2622 = vmatpush1.msra.mxu0 0.0
  %2623 = vmatprep.subr.mxu0 0.0
  %2624 = vmatpush1.msra.mxu0 0.0
  %2625 = vmatprep.subr.mxu0 0.0
  %2626 = vmatpush1.msra.mxu0 0.0
  %2627 = vmatprep.subr.mxu0 0.0
  %2628 = vmatpush1.msra.mxu0 0.0
  %2629 = vmatprep.subr.mxu0 0.0
  %2630 = vmatpush1.msra.mxu0 0.0
  %2631 = vmatprep.subr.mxu0 0.0
  %2632 = vmatpush1.msra.mxu0 0.0
  %2633 = vmatprep.subr.mxu0 0.0
  %2634 = vmatpush1.msra.mxu0 0.0
  %2635 = vmatprep.subr.mxu0 0.0
  %2636 = vmatpush1.msra.mxu0 0.0
  %2637 = vmatprep.subr.mxu0 0.0
  %2638 = vmatpush1.msra.mxu0 0.0
  %2639 = vmatprep.subr.mxu0 0.0
  %2640 = vmatpush1.msra.mxu0 0.0
  %2641 = vmatprep.subr.mxu0 0.0
  %2642 = vmatpush1.msra.mxu0 0.0
  %2643 = vmatprep.subr.mxu0 0.0
  %2644 = vmatpush1.msra.mxu0 %v2589
  %2645 = vmatprep.subr.mxu0 0.0
  %2646 = vmatpush1.msra.mxu0 %v2588
  %2647 = vmatprep.subr.mxu0 0.0
  %2648 = vmatpush2.msra.mxu0 0.0
  %2649 = vmatprep.subr.mxu0 0.0
  %2650 = vmatpush2.msra.mxu0 0.0
  %2651 = vmatprep.subr.mxu0 0.0
  %2652 = vmatpush2.msra.mxu0 0.0
  %2653 = vmatprep.subr.mxu0 0.0
  %2654 = vmatpush2.msra.mxu0 0.0
  %2655 = vmatprep.subr.mxu0 0.0
  %2656 = vmatpush2.msra.mxu0 0.0
  %2657 = vmatprep.subr.mxu0 0.0
  %2658 = vmatpush2.msra.mxu0 0.0
  %2659 = vmatprep.subr.mxu0 0.0
  %2660 = vmatpush2.msra.mxu0 0.0
  %2661 = vmatprep.subr.mxu0 0.0
  %2662 = vmatpush2.msra.mxu0 0.0
  %2663 = vmatprep.subr.mxu0 0.0
  %2664 = vmatpush2.msra.mxu0 0.0
  %2665 = vmatprep.subr.mxu0 0.0
  %2666 = vmatpush2.msra.mxu0 0.0
  %2667 = vmatprep.subr.mxu0 0.0
  %2668 = vmatpush2.msra.mxu0 0.0
  %2669 = vmatprep.subr.mxu0 0.0
  %2670 = vmatpush2.msra.mxu0 0.0
  %2671 = vmatprep.subr.mxu0 0.0
  %2672 = vmatpush2.msra.mxu0 0.0
  %2673 = vmatprep.subr.mxu0 0.0
  %2674 = vmatpush2.msra.mxu0 0.0
  %2675 = vmatprep.subr.mxu0 0.0
  %2676 = vmatpush2.msra.mxu0 0.0
  %2677 = vmatprep.subr.mxu0 0.0
  %2678 = vmatpush2.msra.mxu0 0.0
  %2679 = vmatprep.mubr.f32.mxu0 0.0
  %2680 = vmatmul.mubr.f32.gmra.mxu0 %v2592
  %v2681 = vpop.f32.mrf.mxu0
  %v2682 = vadd.f32 0.0, %v2681
  %v2683 = vpop.f32.mrf.mxu0
  %2684 = vmatprep.mubr.f32.mxu0 0.0
  %2685 = vmatmul.mubr.f32.gmra.mxu0 %v2595
  %v2686 = vpop.f32.mrf.mxu0
  %v2687 = vadd.f32 0.0, %v2686
  %v2688 = vpop.f32.mrf.mxu0
  %2689 = vmatprep.mubr.f32.mxu0 0.0
  %2690 = vmatmul.mubr.f32.gmra.mxu0 %v2598
  %v2691 = vpop.f32.mrf.mxu0
  %v2692 = vadd.f32 0.0, %v2691
  %v2693 = vpop.f32.mrf.mxu0
  %2694 = vmatprep.mubr.f32.mxu0 0.0
  %2695 = vmatmul.mubr.f32.gmra.mxu0 %v2601
  %v2696 = vpop.f32.mrf.mxu0
  %v2697 = vadd.f32 0.0, %v2696
  %v2698 = vpop.f32.mrf.mxu0
  %2699 = vmatprep.mubr.f32.mxu0 0.0
  %2700 = vmatmul.mubr.f32.gmra.mxu0 %v2604
  %v2701 = vpop.f32.mrf.mxu0
  %v2702 = vadd.f32 0.0, %v2701
  %v2703 = vpop.f32.mrf.mxu0
  %2704 = vmatprep.mubr.f32.mxu0 0.0
  %2705 = vmatmul.mubr.f32.gmra.mxu0 %v2607
  %v2706 = vpop.f32.mrf.mxu0
  %v2707 = vadd.f32 0.0, %v2706
  %v2708 = vpop.f32.mrf.mxu0
  %2709 = vmatprep.mubr.f32.mxu0 0.0
  %2710 = vmatmul.mubr.f32.gmra.mxu0 %v2610
  %v2711 = vpop.f32.mrf.mxu0
  %v2712 = vadd.f32 0.0, %v2711
  %v2713 = vpop.f32.mrf.mxu0
  %2714 = vmatprep.mubr.f32.mxu0 0.0
  %2715 = vmatmul.mubr.f32.gmra.mxu0 %v2613
  %v2716 = vpop.f32.mrf.mxu0
  %v2717 = vadd.f32 0.0, %v2716
  %v2718 = vpop.f32.mrf.mxu0
  %2719 = vdwg.mxu0
  %v2721 = vsel %vm137, %v2546, 0
  %v2724 = vsel %vm137, %v2551, 0
  %v2727 = vsel %vm137, %v2556, 0
  %v2730 = vsel %vm137, %v2561, 0
  %v2733 = vsel %vm137, %v2566, 0
  %v2736 = vsel %vm137, %v2571, 0
  %v2739 = vsel %vm137, %v2576, 0
  %v2742 = vsel %vm137, %v2581, 0
  %2744 = vmatprep.subr.mxu0 0.0
  %2745 = vmatpush1.msra.mxu0 0.0
  %2746 = vmatprep.subr.mxu0 0.0
  %2747 = vmatpush1.msra.mxu0 0.0
  %2748 = vmatprep.subr.mxu0 0.0
  %2749 = vmatpush1.msra.mxu0 0.0
  %2750 = vmatprep.subr.mxu0 0.0
  %2751 = vmatpush1.msra.mxu0 0.0
  %2752 = vmatprep.subr.mxu0 0.0
  %2753 = vmatpush1.msra.mxu0 0.0
  %2754 = vmatprep.subr.mxu0 0.0
  %2755 = vmatpush1.msra.mxu0 0.0
  %2756 = vmatprep.subr.mxu0 0.0
  %2757 = vmatpush1.msra.mxu0 0.0
  %2758 = vmatprep.subr.mxu0 0.0
  %2759 = vmatpush1.msra.mxu0 0.0
  %2760 = vmatprep.subr.mxu0 0.0
  %2761 = vmatpush1.msra.mxu0 0.0
  %2762 = vmatprep.subr.mxu0 0.0
  %2763 = vmatpush1.msra.mxu0 0.0
  %2764 = vmatprep.subr.mxu0 0.0
  %2765 = vmatpush1.msra.mxu0 0.0
  %2766 = vmatprep.subr.mxu0 0.0
  %2767 = vmatpush1.msra.mxu0 0.0
  %2768 = vmatprep.subr.mxu0 0.0
  %2769 = vmatpush1.msra.mxu0 %v2587
  %2770 = vmatprep.subr.mxu0 0.0
  %2771 = vmatpush1.msra.mxu0 %v2586
  %2772 = vmatprep.subr.mxu0 0.0
  %2773 = vmatpush1.msra.mxu0 %v2585
  %2774 = vmatprep.subr.mxu0 0.0
  %2775 = vmatpush1.msra.mxu0 %v2584
  %2776 = vmatprep.subr.mxu0 0.0
  %2777 = vmatpush2.msra.mxu0 0.0
  %2778 = vmatprep.subr.mxu0 0.0
  %2779 = vmatpush2.msra.mxu0 0.0
  %2780 = vmatprep.subr.mxu0 0.0
  %2781 = vmatpush2.msra.mxu0 0.0
  %2782 = vmatprep.subr.mxu0 0.0
  %2783 = vmatpush2.msra.mxu0 0.0
  %2784 = vmatprep.subr.mxu0 0.0
  %2785 = vmatpush2.msra.mxu0 0.0
  %2786 = vmatprep.subr.mxu0 0.0
  %2787 = vmatpush2.msra.mxu0 0.0
  %2788 = vmatprep.subr.mxu0 0.0
  %2789 = vmatpush2.msra.mxu0 0.0
  %2790 = vmatprep.subr.mxu0 0.0
  %2791 = vmatpush2.msra.mxu0 0.0
  %2792 = vmatprep.subr.mxu0 0.0
  %2793 = vmatpush2.msra.mxu0 0.0
  %2794 = vmatprep.subr.mxu0 0.0
  %2795 = vmatpush2.msra.mxu0 0.0
  %2796 = vmatprep.subr.mxu0 0.0
  %2797 = vmatpush2.msra.mxu0 0.0
  %2798 = vmatprep.subr.mxu0 0.0
  %2799 = vmatpush2.msra.mxu0 0.0
  %2800 = vmatprep.subr.mxu0 0.0
  %2801 = vmatpush2.msra.mxu0 0.0
  %2802 = vmatprep.subr.mxu0 0.0
  %2803 = vmatpush2.msra.mxu0 0.0
  %2804 = vmatprep.subr.mxu0 0.0
  %2805 = vmatpush2.msra.mxu0 0.0
  %2806 = vmatprep.subr.mxu0 0.0
  %2807 = vmatpush2.msra.mxu0 0.0
  %2808 = vmatprep.mubr.f32.mxu0 0.0
  %2809 = vmatmul.mubr.f32.gmra.mxu0 %v2721
  %v2810 = vpop.f32.mrf.mxu0
  %v2811 = vadd.f32 %v2682, %v2810
  %v2812 = vpop.f32.mrf.mxu0
  %2813 = vmatprep.mubr.f32.mxu0 0.0
  %2814 = vmatmul.mubr.f32.gmra.mxu0 %v2724
  %v2815 = vpop.f32.mrf.mxu0
  %v2816 = vadd.f32 %v2687, %v2815
  %v2817 = vpop.f32.mrf.mxu0
  %2818 = vmatprep.mubr.f32.mxu0 0.0
  %2819 = vmatmul.mubr.f32.gmra.mxu0 %v2727
  %v2820 = vpop.f32.mrf.mxu0
  %v2821 = vadd.f32 %v2692, %v2820
  %v2822 = vpop.f32.mrf.mxu0
  %2823 = vmatprep.mubr.f32.mxu0 0.0
  %2824 = vmatmul.mubr.f32.gmra.mxu0 %v2730
  %v2825 = vpop.f32.mrf.mxu0
  %v2826 = vadd.f32 %v2697, %v2825
  %v2827 = vpop.f32.mrf.mxu0
  %2828 = vmatprep.mubr.f32.mxu0 0.0
  %2829 = vmatmul.mubr.f32.gmra.mxu0 %v2733
  %v2830 = vpop.f32.mrf.mxu0
  %v2831 = vadd.f32 %v2702, %v2830
  %v2832 = vpop.f32.mrf.mxu0
  %2833 = vmatprep.mubr.f32.mxu0 0.0
  %2834 = vmatmul.mubr.f32.gmra.mxu0 %v2736
  %v2835 = vpop.f32.mrf.mxu0
  %v2836 = vadd.f32 %v2707, %v2835
  %v2837 = vpop.f32.mrf.mxu0
  %2838 = vmatprep.mubr.f32.mxu0 0.0
  %2839 = vmatmul.mubr.f32.gmra.mxu0 %v2739
  %v2840 = vpop.f32.mrf.mxu0
  %v2841 = vadd.f32 %v2712, %v2840
  %v2842 = vpop.f32.mrf.mxu0
  %2843 = vmatprep.mubr.f32.mxu0 0.0
  %2844 = vmatmul.mubr.f32.gmra.mxu0 %v2742
  %v2845 = vpop.f32.mrf.mxu0
  %v2846 = vadd.f32 %v2717, %v2845
  %v2847 = vpop.f32.mrf.mxu0
  %2848 = vdwg.mxu0
  %v2849 = vld [vmem:[%s10] sm:$0x1]
  %v2851 = vlaneseq
  %v2852 = vshrl.u32 %v2851, 7
  %v2853 = vsub.s32 0, %v2852
  %v2854 = vrot.slane %v2849, %v2853
  %v2856 = vadd.f32 %v2811, %v2854
  %v2857 = vadd.f32 %v2816, %v2854
  %v2858 = vadd.f32 %v2821, %v2854
  %v2859 = vadd.f32 %v2826, %v2854
  %v2860 = vadd.f32 %v2831, %v2854
  %v2861 = vadd.f32 %v2836, %v2854
  %v2862 = vadd.f32 %v2841, %v2854
  %v2863 = vadd.f32 %v2846, %v2854
  %2864 = vst [vmem:[%s14] sm:$0xff] %v2856
  %2865 = vst [vmem:[%s14 + $0x8] sm:$0xff] %v2857
  %2866 = vst [vmem:[%s14 + $0x10] sm:$0xff] %v2858
  %2867 = vst [vmem:[%s14 + $0x18] sm:$0xff] %v2859
  %2868 = vst [vmem:[%s14 + $0x20] sm:$0xff] %v2860
  %2869 = vst [vmem:[%s14 + $0x28] sm:$0xff] %v2861
  %2870 = vst [vmem:[%s14 + $0x30] sm:$0xff] %v2862
  %2871 = vst [vmem:[%s14 + $0x38] sm:$0xff] %v2863
  // Predicated region
  $region54: #{combined_net_forward.1} parent=0 // pred_check
    _
  $region55: #{combined_net_forward.1} parent=0 // pred_check_branch
    %2873 = sbr.rel (0) target = $region57
  $region56: #{combined_net_forward.1} parent=0 // pred_region
    _
  $region57: #{combined_net_forward.1} parent=0 // pred_fallthru
    _
  // Predicated region
  $region58: #{combined_net_forward.1} parent=0 // pred_check
    _
  $region59: #{combined_net_forward.1} parent=0 // pred_check_branch
    %2875 = sbr.rel (0) target = $region61
  $region60: #{combined_net_forward.1} parent=0 // pred_region
    _
  $region61: #{combined_net_forward.1} parent=0 // pred_fallthru
    _
  // Predicated region
  $region62: #{combined_net_forward.1} parent=0 // pred_check
    _
  $region63: #{combined_net_forward.1} parent=0 // pred_check_branch
    %2877 = sbr.rel (0) target = $region65
  $region64: #{combined_net_forward.1} parent=0 // pred_region
    _
  $region65: #{combined_net_forward.1} parent=0 // pred_fallthru
    _
  // Predicated region
  $region66: #{combined_net_forward.1} parent=0 // pred_check
    _
  $region67: #{combined_net_forward.1} parent=0 // pred_check_branch
    %2879 = sbr.rel (0) target = $region69
  $region68: #{combined_net_forward.1} parent=0 // pred_region
    _
  $region69: #{combined_net_forward.1} parent=0 // pred_fallthru
    _

</llo_original>
